<compile_context>
chip_gen: v7x
topology: tpu7x:2x2x1
jax: 0.10.0
libtpu: 0.0.40
codegen_flags: <defaults>
</compile_context>

<pallas_src>
import functools

import jax
import jax.numpy as jnp
from jax.experimental import pallas as pl
from jax.experimental.pallas import tpu as pltpu

PATCH = 4            # net.patch_embed.patch_size[0]
NUM_RES = 2          # num_resconv_block
ROT_DIM = 9          # '9D' rotation representation
OUT_DIM = ROT_DIM + 3
OUT_PAD = 128        # lane-dense padded output width ([rot | t | zeros])
MATMUL_DTYPE = jnp.bfloat16   # MXU operand dtype; accumulation stays f32


def pose_head_kernel(tok_ref, wproj_ref, bproj_ref, wres_ref, bres_ref,
                     wmlp_ref, bmlp_ref, wout_ref, bout_ref,
                     out_ref, pool_acc, *, S):
    m = pl.program_id(1)
    n_m = pl.num_programs(1)

    @pl.when(m == 0)
    def _init():
        pool_acc[...] = jnp.zeros_like(pool_acc)

    # proj: Linear(D -> C).  Tokens arrive f32; cast to bf16 in VMEM just
    # before the MXU dot (no wrapper-side cast / extra HBM pass).
    tok = tok_ref[0].astype(MATMUL_DTYPE)                                  # (TM, D)
    x = jnp.dot(tok, wproj_ref[...],
                preferred_element_type=jnp.float32) + bproj_ref[...]       # (TM, C) f32

    # ResConvBlocks: three 1x1 convs (per-token channel matmuls) + ReLU each,
    # identity skip (in_channels == out_channels) + residual add.
    # Intermediates between convs stay bf16; last conv output stays f32 for
    # the residual add (numerically identical to the all-f32 intermediate
    # version since the next dot consumed bf16 anyway).
    for blk in range(NUM_RES):
        y = x.astype(MATMUL_DTYPE)
        for c in range(3):
            k = blk * 3 + c
            y32 = jnp.maximum(
                jnp.dot(y, wres_ref[k], preferred_element_type=jnp.float32)
                + bres_ref[k], 0.0)
            y = y32.astype(MATMUL_DTYPE) if c < 2 else y32
        x = x + y                                                          # (TM, C) f32

    # AdaptiveAvgPool2d(1): incremental pooled sum over this token tile
    # (no reshape / relayout); divide by S at the last tile.
    pool_acc[...] += jnp.sum(x, axis=0, keepdims=True)                     # (1, C)

    @pl.when(m == n_m - 1)
    def _tail():
        f = pool_acc[...] * (1.0 / S)                                      # (1, C) f32
        # more_mlps: two Linear(C, C) + ReLU.
        for i in range(2):
            f = jnp.maximum(
                jnp.dot(f.astype(MATMUL_DTYPE), wmlp_ref[i],
                        preferred_element_type=jnp.float32) + bmlp_ref[i], 0.0)
        # fc_rot (9) and fc_t (3), fused + zero-padded to a lane-dense
        # (C, 128) matmul: columns [0:9]=rot, [9:12]=t, [12:128]=0.
        out = jnp.dot(f.astype(MATMUL_DTYPE), wout_ref[...],
                      preferred_element_type=jnp.float32) + bout_ref[...]  # (1, 128)
        out_ref[...] = out.reshape(out_ref.shape).astype(out_ref.dtype)


def _choose_tm(S):
    """Largest token-tile size (multiple of 8, <= 512) that divides S."""
    if S % 8 != 0:
        return S                     # full-extent block: always legal
    for cand in (512, 256, 128, 64, 32, 16, 8):
        if cand <= S and S % cand == 0:
            return cand
    return S


def _derive_vmem_limit(resident_bytes):
    """Per-generation VMEM budget: resident bytes + headroom, capped at 3/4 of
    this chip's physical VMEM (v7x has only 64 MiB/TC vs 128 on v5e/v6e)."""
    try:
        phys = int(pltpu.get_tpu_info().vmem_capacity_bytes)
    except Exception:
        phys = 64 << 20              # conservative (v7x-sized) fallback
    budget = int(resident_bytes) + (8 << 20)   # pipeline / compiler scratch headroom
    budget = max(budget, 16 << 20)
    return int(min(budget, (phys * 3) // 4))


def pose_head_pallas(tokens, p):
    """tokens: (B, S, D) f32; p: prepared params (see prepare_params)."""
    B, S, D = tokens.shape
    C = p["wproj"].shape[1]
    TM = _choose_tm(S)
    n_m = S // TM

    def const_spec(shape):
        # Constant-index weight/bias: fetched once, single-buffered.
        zeros = (0,) * len(shape)
        return pl.BlockSpec(shape, lambda b, m, _z=zeros: _z,
                            pipeline_mode=pl.Buffered(1))

    bf16, f32 = 2, 4
    resident = (
        (D * C + 3 * NUM_RES * C * C + 2 * C * C + C * OUT_PAD) * bf16   # weights (1-buffered)
        + (C + 3 * NUM_RES * C + 2 * C + OUT_PAD) * f32                  # biases
        + 2 * TM * D * f32                                               # token tile (2-buffered)
        + 4 * TM * C * f32                                               # live activations
        + 2 * OUT_PAD * f32 + C * f32                                    # output block + pool scratch
    )
    vmem_limit = _derive_vmem_limit(resident)

    kernel = functools.partial(pose_head_kernel, S=S)
    out = pl.pallas_call(
        kernel,
        out_shape=jax.ShapeDtypeStruct((B, 1, OUT_PAD), jnp.float32),
        grid=(B, n_m),   # batch parallel (megacore), token tiles arbitrary (pooled accumulator)
        in_specs=[
            pl.BlockSpec((1, TM, D), lambda b, m: (b, m, 0)),   # tokens (f32, pipelined)
            const_spec((D, C)),                                 # wproj  bf16
            const_spec((1, C)),                                 # bproj  f32
            const_spec((3 * NUM_RES, C, C)),                    # wres   bf16
            const_spec((3 * NUM_RES, C)),                       # bres   f32
            const_spec((2, C, C)),                              # wmlp   bf16
            const_spec((2, C)),                                 # bmlp   f32
            const_spec((C, OUT_PAD)),                           # wout   bf16
            const_spec((1, OUT_PAD)),                           # bout   f32
        ],
        out_specs=pl.BlockSpec((1, 1, OUT_PAD), lambda b, m: (b, 0, 0)),
        scratch_shapes=[pltpu.VMEM((1, C), jnp.float32)],        # per-batch pooled sum
        compiler_params=pltpu.CompilerParams(
            dimension_semantics=("parallel", "arbitrary"),
            vmem_limit_bytes=vmem_limit),
    )(tokens, p["wproj"], p["bproj"], p["wres"], p["bres"],
      p["wmlp"], p["bmlp"], p["wout"], p["bout"])
    return out[:, 0, :OUT_DIM]                                   # (B, 12)


# ------- plain-JAX glue: 9D -> SO(3) and 4x4 pose assembly -------
# TODO(synk): torch.svd on 3x3 matrices has no Pallas equivalent; done in JAX.
def svd_orthogonalize(m_flat):
    m = m_flat.reshape(-1, 3, 3)
    # F.normalize(p=2, dim=-1): per-row L2 normalization with eps clamp.
    norm = jnp.maximum(jnp.linalg.norm(m, axis=-1, keepdims=True), 1e-12)
    m_t = jnp.swapaxes(m / norm, -1, -2)
    u, s, vh = jnp.linalg.svd(m_t, full_matrices=False)
    v = jnp.swapaxes(vh, -1, -2)
    det = jnp.linalg.det(jnp.matmul(v, jnp.swapaxes(u, -1, -2)))
    r = jnp.matmul(
        jnp.concatenate([v[:, :, :-1], v[:, :, -1:] * det[:, None, None]], axis=2),
        jnp.swapaxes(u, -1, -2))
    return r


def convert_pose_to_4x4(out_r, out_t):
    B = out_r.shape[0]
    r = svd_orthogonalize(out_r)
    pose = jnp.zeros((B, 4, 4), jnp.float32)
    pose = pose.at[:, :3, :3].set(r)
    pose = pose.at[:, :3, 3].set(out_t)
    pose = pose.at[:, 3, 3].set(1.0)
    return pose


def pose_head_forward(decout, img_shape, prepared_params):
    tokens = decout[-1]
    out = pose_head_pallas(tokens, prepared_params)
    out_r = out[:, :ROT_DIM]
    out_t = out[:, ROT_DIM:]
    return {"pose": convert_pose_to_4x4(out_r, out_t)}


# ------- deterministic parameter init (synthetic, PyTorch-like shapes) -------
def init_params(key, D, C):
    keys = jax.random.split(key, 11)

    def lin(k, fan_in, fan_out):
        lim = 1.0 / jnp.sqrt(jnp.float32(fan_in))
        kw, kb = jax.random.split(k)
        w = jax.random.uniform(kw, (fan_in, fan_out), jnp.float32, -lim, lim)
        b = jax.random.uniform(kb, (fan_out,), jnp.float32, -lim, lim)
        return w, b

    wproj, bproj = lin(keys[0], D, C)                        # nn.Linear(D, C)

    wres, bres = [], []
    for i in range(NUM_RES * 3):                             # 6x Conv2d(C, C, 1)
        w, b = lin(keys[1 + i], C, C)
        wres.append(w)
        bres.append(b)
    wres = jnp.stack(wres)                                   # (6, C, C)
    bres = jnp.stack(bres)                                   # (6, C)

    wm1, bm1 = lin(keys[7], C, C)                            # more_mlps[0]
    wm2, bm2 = lin(keys[8], C, C)                            # more_mlps[2]
    wmlp = jnp.stack([wm1, wm2])                             # (2, C, C)
    bmlp = jnp.stack([bm1, bm2])                             # (2, C)

    wrot, brot = lin(keys[9], C, ROT_DIM)                    # fc_rot
    wt, bt = lin(keys[10], C, 3)                             # fc_t

    return dict(wproj=wproj, bproj=bproj, wres=wres, bres=bres,
                wmlp=wmlp, bmlp=bmlp, wrot=wrot, brot=brot, wt=wt, bt=bt)


def prepare_params(params):
    """One-time cast/pad of params for the kernel (call outside the hot path)."""
    C = params["wproj"].shape[1]
    wout = jnp.concatenate([params["wrot"], params["wt"]], axis=1)       # (C, 12)
    bout = jnp.concatenate([params["brot"], params["bt"]], axis=0)       # (12,)
    wout_pad = jnp.zeros((C, OUT_PAD), jnp.float32).at[:, :OUT_DIM].set(wout)
    bout_pad = jnp.zeros((1, OUT_PAD), jnp.float32).at[0, :OUT_DIM].set(bout)
    return dict(
        wproj=params["wproj"].astype(MATMUL_DTYPE),
        bproj=params["bproj"].reshape(1, C),                 # f32
        wres=params["wres"].astype(MATMUL_DTYPE),
        bres=params["bres"],                                 # (6, C) f32
        wmlp=params["wmlp"].astype(MATMUL_DTYPE),
        bmlp=params["bmlp"],                                 # (2, C) f32
        wout=wout_pad.astype(MATMUL_DTYPE),
        bout=bout_pad,                                       # (1, 128) f32
    )


if __name__ == "__main__":
    key = jax.random.PRNGKey(0)
    B, D = 2, 32                      # batch, dec_embed_dim
    H = W = 16                        # image size
    S = (H // PATCH) * (W // PATCH)   # 16 tokens
    C = 4 * PATCH * PATCH             # 64 = output_dim

    k_tok, k_par = jax.random.split(key)
    tokens = jax.random.normal(k_tok, (B, S, D), jnp.float32)
    params = prepare_params(init_params(k_par, D, C))

    res = pose_head_forward([tokens], (H, W), params)
    pose = jax.block_until_ready(res["pose"])
    assert pose.shape == (B, 4, 4)
    assert bool(jnp.all(jnp.isfinite(pose)))
    print("KERNEL_OK")
</pallas_src>

<mosaic_0001>
module attributes {stable_mosaic.version = 11 : i64} {
  func.func @pose_head_kernel(%arg0: i32, %arg1: i32, %arg2: memref<1x16x32xf32, #tpu.memory_space<vmem>>, %arg3: memref<32x64xbf16, #tpu.memory_space<vmem>>, %arg4: memref<1x64xf32, #tpu.memory_space<vmem>>, %arg5: memref<6x64x64xbf16, #tpu.memory_space<vmem>>, %arg6: memref<6x64xf32, #tpu.memory_space<vmem>>, %arg7: memref<2x64x64xbf16, #tpu.memory_space<vmem>>, %arg8: memref<2x64xf32, #tpu.memory_space<vmem>>, %arg9: memref<64x128xbf16, #tpu.memory_space<vmem>>, %arg10: memref<1x128xf32, #tpu.memory_space<vmem>>, %arg11: memref<1x1x128xf32, #tpu.memory_space<vmem>>, %arg12: memref<1x64xf32, #tpu.memory_space<vmem>>) attributes {dimension_semantics = [#tpu.dimension_semantics<parallel>, #tpu.dimension_semantics<arbitrary>], iteration_bounds = array<i64: 2, 1>, scalar_prefetch = 0 : i64, scratch_operands = 1 : i64, tpu.core_type = #tpu.core_type<tc>, window_params = [{transform_indices = @transform_0, window_bounds = array<i64: 1, 16, 32>}, {pipeline_mode = #tpu.pipeline_mode<synchronous>, transform_indices = @transform_1, window_bounds = array<i64: 32, 64>}, {pipeline_mode = #tpu.pipeline_mode<synchronous>, transform_indices = @transform_2, window_bounds = array<i64: 1, 64>}, {pipeline_mode = #tpu.pipeline_mode<synchronous>, transform_indices = @transform_3, window_bounds = array<i64: 6, 64, 64>}, {pipeline_mode = #tpu.pipeline_mode<synchronous>, transform_indices = @transform_4, window_bounds = array<i64: 6, 64>}, {pipeline_mode = #tpu.pipeline_mode<synchronous>, transform_indices = @transform_5, window_bounds = array<i64: 2, 64, 64>}, {pipeline_mode = #tpu.pipeline_mode<synchronous>, transform_indices = @transform_6, window_bounds = array<i64: 2, 64>}, {pipeline_mode = #tpu.pipeline_mode<synchronous>, transform_indices = @transform_7, window_bounds = array<i64: 64, 128>}, {pipeline_mode = #tpu.pipeline_mode<synchronous>, transform_indices = @transform_8, window_bounds = array<i64: 1, 128>}, {transform_indices = @transform_9, window_bounds = array<i64: 1, 1, 128>}]} {
    %c0_i32 = arith.constant 0 : i32
    %0 = arith.cmpi eq, %arg1, %c0_i32 : i32
    %1 = arith.extui %0 : i1 to i32
    %c0_i32_0 = arith.constant 0 : i32
    %2 = arith.cmpi ne, %1, %c0_i32_0 : i32
    scf.if %2 {
      %cst_51 = arith.constant 0.000000e+00 : f32
      %87 = vector.broadcast %cst_51 : f32 to vector<1x64xf32>
      %c0_52 = arith.constant 0 : index
      %c0_53 = arith.constant 0 : index
      %88 = vector.load %arg12[%c0_52, %c0_53] : memref<1x64xf32, #tpu.memory_space<vmem>>, vector<1x64xf32>
      tpu.vector_store %arg12[%c0_52, %c0_53], %87 {strides = array<i32>} : memref<1x64xf32, #tpu.memory_space<vmem>>, vector<1x64xf32>,
    } else {
    }
    %c0 = arith.constant 0 : index
    %c0_1 = arith.constant 0 : index
    %c0_2 = arith.constant 0 : index
    %3 = vector.load %arg2[%c0, %c0_1, %c0_2] : memref<1x16x32xf32, #tpu.memory_space<vmem>>, vector<1x16x32xf32>
    %4 = vector.shape_cast %3 : vector<1x16x32xf32> to vector<16x32xf32>
    %5 = arith.truncf %4 : vector<16x32xf32> to vector<16x32xbf16>
    %c0_3 = arith.constant 0 : index
    %c0_4 = arith.constant 0 : index
    %6 = vector.load %arg3[%c0_3, %c0_4] : memref<32x64xbf16, #tpu.memory_space<vmem>>, vector<32x64xbf16>
    %cst = arith.constant dense<0.000000e+00> : vector<16x64xf32>
    %7 = tpu.matmul %5, %6, %cst {dimension_numbers = #tpu.dot_dimension_numbers<[1], [0], [0], [1], [0, 0, 1, 1], [], []>} : vector<16x32xbf16>, vector<32x64xbf16>, vector<16x64xf32> -> vector<16x64xf32>
    %c0_5 = arith.constant 0 : index
    %c0_6 = arith.constant 0 : index
    %8 = vector.load %arg4[%c0_5, %c0_6] : memref<1x64xf32, #tpu.memory_space<vmem>>, vector<1x64xf32>
    %9 = vector.broadcast %8 : vector<1x64xf32> to vector<16x64xf32>
    %10 = arith.addf %7, %9 : vector<16x64xf32>
    %11 = arith.truncf %10 : vector<16x64xf32> to vector<16x64xbf16>
    %c0_7 = arith.constant 0 : index
    %c0_8 = arith.constant 0 : index
    %c0_9 = arith.constant 0 : index
    %12 = vector.load %arg5[%c0_7, %c0_8, %c0_9] : memref<6x64x64xbf16, #tpu.memory_space<vmem>>, vector<1x64x64xbf16>
    %13 = vector.shape_cast %12 : vector<1x64x64xbf16> to vector<64x64xbf16>
    %cst_10 = arith.constant dense<0.000000e+00> : vector<16x64xf32>
    %14 = tpu.matmul %11, %13, %cst_10 {dimension_numbers = #tpu.dot_dimension_numbers<[1], [0], [0], [1], [0, 0, 1, 1], [], []>} : vector<16x64xbf16>, vector<64x64xbf16>, vector<16x64xf32> -> vector<16x64xf32>
    %c0_11 = arith.constant 0 : index
    %c0_12 = arith.constant 0 : index
    %15 = vector.load %arg6[%c0_11, %c0_12] : memref<6x64xf32, #tpu.memory_space<vmem>>, vector<1x64xf32>
    %16 = vector.shape_cast %15 : vector<1x64xf32> to vector<64xf32>
    %17 = vector.shape_cast %16 : vector<64xf32> to vector<1x64xf32>
    %18 = vector.broadcast %17 : vector<1x64xf32> to vector<16x64xf32>
    %19 = arith.addf %14, %18 : vector<16x64xf32>
    %cst_13 = arith.constant 0.000000e+00 : f32
    %20 = vector.broadcast %cst_13 : f32 to vector<16x64xf32>
    %21 = arith.maximumf %19, %20 : vector<16x64xf32>
    %22 = arith.truncf %21 : vector<16x64xf32> to vector<16x64xbf16>
    %c1 = arith.constant 1 : index
    %c0_14 = arith.constant 0 : index
    %c0_15 = arith.constant 0 : index
    %23 = vector.load %arg5[%c1, %c0_14, %c0_15] : memref<6x64x64xbf16, #tpu.memory_space<vmem>>, vector<1x64x64xbf16>
    %24 = vector.shape_cast %23 : vector<1x64x64xbf16> to vector<64x64xbf16>
    %cst_16 = arith.constant dense<0.000000e+00> : vector<16x64xf32>
    %25 = tpu.matmul %22, %24, %cst_16 {dimension_numbers = #tpu.dot_dimension_numbers<[1], [0], [0], [1], [0, 0, 1, 1], [], []>} : vector<16x64xbf16>, vector<64x64xbf16>, vector<16x64xf32> -> vector<16x64xf32>
    %c1_17 = arith.constant 1 : index
    %c0_18 = arith.constant 0 : index
    %26 = vector.load %arg6[%c1_17, %c0_18] : memref<6x64xf32, #tpu.memory_space<vmem>>, vector<1x64xf32>
    %27 = vector.shape_cast %26 : vector<1x64xf32> to vector<64xf32>
    %28 = vector.shape_cast %27 : vector<64xf32> to vector<1x64xf32>
    %29 = vector.broadcast %28 : vector<1x64xf32> to vector<16x64xf32>
    %30 = arith.addf %25, %29 : vector<16x64xf32>
    %cst_19 = arith.constant 0.000000e+00 : f32
    %31 = vector.broadcast %cst_19 : f32 to vector<16x64xf32>
    %32 = arith.maximumf %30, %31 : vector<16x64xf32>
    %33 = arith.truncf %32 : vector<16x64xf32> to vector<16x64xbf16>
    %c2 = arith.constant 2 : index
    %c0_20 = arith.constant 0 : index
    %c0_21 = arith.constant 0 : index
    %34 = vector.load %arg5[%c2, %c0_20, %c0_21] : memref<6x64x64xbf16, #tpu.memory_space<vmem>>, vector<1x64x64xbf16>
    %35 = vector.shape_cast %34 : vector<1x64x64xbf16> to vector<64x64xbf16>
    %cst_22 = arith.constant dense<0.000000e+00> : vector<16x64xf32>
    %36 = tpu.matmul %33, %35, %cst_22 {dimension_numbers = #tpu.dot_dimension_numbers<[1], [0], [0], [1], [0, 0, 1, 1], [], []>} : vector<16x64xbf16>, vector<64x64xbf16>, vector<16x64xf32> -> vector<16x64xf32>
    %c2_23 = arith.constant 2 : index
    %c0_24 = arith.constant 0 : index
    %37 = vector.load %arg6[%c2_23, %c0_24] : memref<6x64xf32, #tpu.memory_space<vmem>>, vector<1x64xf32>
    %38 = vector.shape_cast %37 : vector<1x64xf32> to vector<64xf32>
    %39 = vector.shape_cast %38 : vector<64xf32> to vector<1x64xf32>
    %40 = vector.broadcast %39 : vector<1x64xf32> to vector<16x64xf32>
    %41 = arith.addf %36, %40 : vector<16x64xf32>
    %cst_25 = arith.constant 0.000000e+00 : f32
    %42 = vector.broadcast %cst_25 : f32 to vector<16x64xf32>
    %43 = arith.maximumf %41, %42 : vector<16x64xf32>
    %44 = arith.addf %10, %43 : vector<16x64xf32>
    %45 = arith.truncf %44 : vector<16x64xf32> to vector<16x64xbf16>
    %c3 = arith.constant 3 : index
    %c0_26 = arith.constant 0 : index
    %c0_27 = arith.constant 0 : index
    %46 = vector.load %arg5[%c3, %c0_26, %c0_27] : memref<6x64x64xbf16, #tpu.memory_space<vmem>>, vector<1x64x64xbf16>
    %47 = vector.shape_cast %46 : vector<1x64x64xbf16> to vector<64x64xbf16>
    %cst_28 = arith.constant dense<0.000000e+00> : vector<16x64xf32>
    %48 = tpu.matmul %45, %47, %cst_28 {dimension_numbers = #tpu.dot_dimension_numbers<[1], [0], [0], [1], [0, 0, 1, 1], [], []>} : vector<16x64xbf16>, vector<64x64xbf16>, vector<16x64xf32> -> vector<16x64xf32>
    %c3_29 = arith.constant 3 : index
    %c0_30 = arith.constant 0 : index
    %49 = vector.load %arg6[%c3_29, %c0_30] : memref<6x64xf32, #tpu.memory_space<vmem>>, vector<1x64xf32>
    %50 = vector.shape_cast %49 : vector<1x64xf32> to vector<64xf32>
    %51 = vector.shape_cast %50 : vector<64xf32> to vector<1x64xf32>
    %52 = vector.broadcast %51 : vector<1x64xf32> to vector<16x64xf32>
    %53 = arith.addf %48, %52 : vector<16x64xf32>
    %cst_31 = arith.constant 0.000000e+00 : f32
    %54 = vector.broadcast %cst_31 : f32 to vector<16x64xf32>
    %55 = arith.maximumf %53, %54 : vector<16x64xf32>
    %56 = arith.truncf %55 : vector<16x64xf32> to vector<16x64xbf16>
    %c4 = arith.constant 4 : index
    %c0_32 = arith.constant 0 : index
    %c0_33 = arith.constant 0 : index
    %57 = vector.load %arg5[%c4, %c0_32, %c0_33] : memref<6x64x64xbf16, #tpu.memory_space<vmem>>, vector<1x64x64xbf16>
    %58 = vector.shape_cast %57 : vector<1x64x64xbf16> to vector<64x64xbf16>
    %cst_34 = arith.constant dense<0.000000e+00> : vector<16x64xf32>
    %59 = tpu.matmul %56, %58, %cst_34 {dimension_numbers = #tpu.dot_dimension_numbers<[1], [0], [0], [1], [0, 0, 1, 1], [], []>} : vector<16x64xbf16>, vector<64x64xbf16>, vector<16x64xf32> -> vector<16x64xf32>
    %c4_35 = arith.constant 4 : index
    %c0_36 = arith.constant 0 : index
    %60 = vector.load %arg6[%c4_35, %c0_36] : memref<6x64xf32, #tpu.memory_space<vmem>>, vector<1x64xf32>
    %61 = vector.shape_cast %60 : vector<1x64xf32> to vector<64xf32>
    %62 = vector.shape_cast %61 : vector<64xf32> to vector<1x64xf32>
    %63 = vector.broadcast %62 : vector<1x64xf32> to vector<16x64xf32>
    %64 = arith.addf %59, %63 : vector<16x64xf32>
    %cst_37 = arith.constant 0.000000e+00 : f32
    %65 = vector.broadcast %cst_37 : f32 to vector<16x64xf32>
    %66 = arith.maximumf %64, %65 : vector<16x64xf32>
    %67 = arith.truncf %66 : vector<16x64xf32> to vector<16x64xbf16>
    %c5 = arith.constant 5 : index
    %c0_38 = arith.constant 0 : index
    %c0_39 = arith.constant 0 : index
    %68 = vector.load %arg5[%c5, %c0_38, %c0_39] : memref<6x64x64xbf16, #tpu.memory_space<vmem>>, vector<1x64x64xbf16>
    %69 = vector.shape_cast %68 : vector<1x64x64xbf16> to vector<64x64xbf16>
    %cst_40 = arith.constant dense<0.000000e+00> : vector<16x64xf32>
    %70 = tpu.matmul %67, %69, %cst_40 {dimension_numbers = #tpu.dot_dimension_numbers<[1], [0], [0], [1], [0, 0, 1, 1], [], []>} : vector<16x64xbf16>, vector<64x64xbf16>, vector<16x64xf32> -> vector<16x64xf32>
    %c5_41 = arith.constant 5 : index
    %c0_42 = arith.constant 0 : index
    %71 = vector.load %arg6[%c5_41, %c0_42] : memref<6x64xf32, #tpu.memory_space<vmem>>, vector<1x64xf32>
    %72 = vector.shape_cast %71 : vector<1x64xf32> to vector<64xf32>
    %73 = vector.shape_cast %72 : vector<64xf32> to vector<1x64xf32>
    %74 = vector.broadcast %73 : vector<1x64xf32> to vector<16x64xf32>
    %75 = arith.addf %70, %74 : vector<16x64xf32>
    %cst_43 = arith.constant 0.000000e+00 : f32
    %76 = vector.broadcast %cst_43 : f32 to vector<16x64xf32>
    %77 = arith.maximumf %75, %76 : vector<16x64xf32>
    %78 = arith.addf %44, %77 : vector<16x64xf32>
    %c0_44 = arith.constant 0 : index
    %c0_45 = arith.constant 0 : index
    %79 = vector.load %arg12[%c0_44, %c0_45] : memref<1x64xf32, #tpu.memory_space<vmem>>, vector<1x64xf32>
    %cst_46 = arith.constant dense<0.000000e+00> : vector<64xf32>
    %80 = vector.multi_reduction <add>, %78, %cst_46 [0] : vector<16x64xf32> to vector<64xf32>
    %81 = vector.shape_cast %80 : vector<64xf32> to vector<1x64xf32>
    %82 = arith.addf %79, %81 : vector<1x64xf32>
    %c0_47 = arith.constant 0 : index
    %c0_48 = arith.constant 0 : index
    %83 = vector.load %arg12[%c0_47, %c0_48] : memref<1x64xf32, #tpu.memory_space<vmem>>, vector<1x64xf32>
    tpu.vector_store %arg12[%c0_47, %c0_48], %82 {strides = array<i32>} : memref<1x64xf32, #tpu.memory_space<vmem>>, vector<1x64xf32>,
    %c0_i32_49 = arith.constant 0 : i32
    %84 = arith.cmpi eq, %arg1, %c0_i32_49 : i32
    %85 = arith.extui %84 : i1 to i32
    %c0_i32_50 = arith.constant 0 : i32
    %86 = arith.cmpi ne, %85, %c0_i32_50 : i32
    scf.if %86 {
      %c0_51 = arith.constant 0 : index
      %c0_52 = arith.constant 0 : index
      %87 = vector.load %arg12[%c0_51, %c0_52] : memref<1x64xf32, #tpu.memory_space<vmem>>, vector<1x64xf32>
      %cst_53 = arith.constant 6.250000e-02 : f32
      %88 = vector.broadcast %cst_53 : f32 to vector<1x64xf32>
      %89 = arith.mulf %87, %88 : vector<1x64xf32>
      %90 = arith.truncf %89 : vector<1x64xf32> to vector<1x64xbf16>
      %c0_54 = arith.constant 0 : index
      %c0_55 = arith.constant 0 : index
      %c0_56 = arith.constant 0 : index
      %91 = vector.load %arg7[%c0_54, %c0_55, %c0_56] : memref<2x64x64xbf16, #tpu.memory_space<vmem>>, vector<1x64x64xbf16>
      %92 = vector.shape_cast %91 : vector<1x64x64xbf16> to vector<64x64xbf16>
      %cst_57 = arith.constant dense<0.000000e+00> : vector<1x64xf32>
      %93 = tpu.matmul %90, %92, %cst_57 {dimension_numbers = #tpu.dot_dimension_numbers<[1], [0], [0], [1], [0, 0, 1, 1], [], []>} : vector<1x64xbf16>, vector<64x64xbf16>, vector<1x64xf32> -> vector<1x64xf32>
      %c0_58 = arith.constant 0 : index
      %c0_59 = arith.constant 0 : index
      %94 = vector.load %arg8[%c0_58, %c0_59] : memref<2x64xf32, #tpu.memory_space<vmem>>, vector<1x64xf32>
      %95 = vector.shape_cast %94 : vector<1x64xf32> to vector<64xf32>
      %96 = vector.shape_cast %95 : vector<64xf32> to vector<1x64xf32>
      %97 = arith.addf %93, %96 : vector<1x64xf32>
      %cst_60 = arith.constant 0.000000e+00 : f32
      %98 = vector.broadcast %cst_60 : f32 to vector<1x64xf32>
      %99 = arith.maximumf %97, %98 : vector<1x64xf32>
      %100 = arith.truncf %99 : vector<1x64xf32> to vector<1x64xbf16>
      %c1_61 = arith.constant 1 : index
      %c0_62 = arith.constant 0 : index
      %c0_63 = arith.constant 0 : index
      %101 = vector.load %arg7[%c1_61, %c0_62, %c0_63] : memref<2x64x64xbf16, #tpu.memory_space<vmem>>, vector<1x64x64xbf16>
      %102 = vector.shape_cast %101 : vector<1x64x64xbf16> to vector<64x64xbf16>
      %cst_64 = arith.constant dense<0.000000e+00> : vector<1x64xf32>
      %103 = tpu.matmul %100, %102, %cst_64 {dimension_numbers = #tpu.dot_dimension_numbers<[1], [0], [0], [1], [0, 0, 1, 1], [], []>} : vector<1x64xbf16>, vector<64x64xbf16>, vector<1x64xf32> -> vector<1x64xf32>
      %c1_65 = arith.constant 1 : index
      %c0_66 = arith.constant 0 : index
      %104 = vector.load %arg8[%c1_65, %c0_66] : memref<2x64xf32, #tpu.memory_space<vmem>>, vector<1x64xf32>
      %105 = vector.shape_cast %104 : vector<1x64xf32> to vector<64xf32>
      %106 = vector.shape_cast %105 : vector<64xf32> to vector<1x64xf32>
      %107 = arith.addf %103, %106 : vector<1x64xf32>
      %cst_67 = arith.constant 0.000000e+00 : f32
      %108 = vector.broadcast %cst_67 : f32 to vector<1x64xf32>
      %109 = arith.maximumf %107, %108 : vector<1x64xf32>
      %110 = arith.truncf %109 : vector<1x64xf32> to vector<1x64xbf16>
      %c0_68 = arith.constant 0 : index
      %c0_69 = arith.constant 0 : index
      %111 = vector.load %arg9[%c0_68, %c0_69] : memref<64x128xbf16, #tpu.memory_space<vmem>>, vector<64x128xbf16>
      %cst_70 = arith.constant dense<0.000000e+00> : vector<1x128xf32>
      %112 = tpu.matmul %110, %111, %cst_70 {dimension_numbers = #tpu.dot_dimension_numbers<[1], [0], [0], [1], [0, 0, 1, 1], [], []>} : vector<1x64xbf16>, vector<64x128xbf16>, vector<1x128xf32> -> vector<1x128xf32>
      %c0_71 = arith.constant 0 : index
      %c0_72 = arith.constant 0 : index
      %113 = vector.load %arg10[%c0_71, %c0_72] : memref<1x128xf32, #tpu.memory_space<vmem>>, vector<1x128xf32>
      %114 = arith.addf %112, %113 : vector<1x128xf32>
      %115 = vector.shape_cast %114 : vector<1x128xf32> to vector<1x1x128xf32>
      %c0_73 = arith.constant 0 : index
      %c0_74 = arith.constant 0 : index
      %c0_75 = arith.constant 0 : index
      %116 = vector.load %arg11[%c0_73, %c0_74, %c0_75] : memref<1x1x128xf32, #tpu.memory_space<vmem>>, vector<1x1x128xf32>
      tpu.vector_store %arg11[%c0_73, %c0_74, %c0_75], %115 {strides = array<i32>} : memref<1x1x128xf32, #tpu.memory_space<vmem>>, vector<1x1x128xf32>,
    } else {
    }
    return
  }
  func.func @transform_0(%arg0: i32, %arg1: i32) -> (i32, i32, i32) {
    %c0_i32 = arith.constant 0 : i32
    %c0_i32_0 = arith.constant 0 : i32
    return %arg0, %arg1, %c0_i32 : i32, i32, i32
  }
  func.func @transform_1(%arg0: i32, %arg1: i32) -> (i32, i32) {
    %c0_i32 = arith.constant 0 : i32
    %c0_i32_0 = arith.constant 0 : i32
    %c0_i32_1 = arith.constant 0 : i32
    return %c0_i32, %c0_i32_0 : i32, i32
  }
  func.func @transform_2(%arg0: i32, %arg1: i32) -> (i32, i32) {
    %c0_i32 = arith.constant 0 : i32
    %c0_i32_0 = arith.constant 0 : i32
    %c0_i32_1 = arith.constant 0 : i32
    return %c0_i32, %c0_i32_0 : i32, i32
  }
  func.func @transform_3(%arg0: i32, %arg1: i32) -> (i32, i32, i32) {
    %c0_i32 = arith.constant 0 : i32
    %c0_i32_0 = arith.constant 0 : i32
    %c0_i32_1 = arith.constant 0 : i32
    %c0_i32_2 = arith.constant 0 : i32
    return %c0_i32, %c0_i32_0, %c0_i32_1 : i32, i32, i32
  }
  func.func @transform_4(%arg0: i32, %arg1: i32) -> (i32, i32) {
    %c0_i32 = arith.constant 0 : i32
    %c0_i32_0 = arith.constant 0 : i32
    %c0_i32_1 = arith.constant 0 : i32
    return %c0_i32, %c0_i32_0 : i32, i32
  }
  func.func @transform_5(%arg0: i32, %arg1: i32) -> (i32, i32, i32) {
    %c0_i32 = arith.constant 0 : i32
    %c0_i32_0 = arith.constant 0 : i32
    %c0_i32_1 = arith.constant 0 : i32
    %c0_i32_2 = arith.constant 0 : i32
    return %c0_i32, %c0_i32_0, %c0_i32_1 : i32, i32, i32
  }
  func.func @transform_6(%arg0: i32, %arg1: i32) -> (i32, i32) {
    %c0_i32 = arith.constant 0 : i32
    %c0_i32_0 = arith.constant 0 : i32
    %c0_i32_1 = arith.constant 0 : i32
    return %c0_i32, %c0_i32_0 : i32, i32
  }
  func.func @transform_7(%arg0: i32, %arg1: i32) -> (i32, i32) {
    %c0_i32 = arith.constant 0 : i32
    %c0_i32_0 = arith.constant 0 : i32
    %c0_i32_1 = arith.constant 0 : i32
    return %c0_i32, %c0_i32_0 : i32, i32
  }
  func.func @transform_8(%arg0: i32, %arg1: i32) -> (i32, i32) {
    %c0_i32 = arith.constant 0 : i32
    %c0_i32_0 = arith.constant 0 : i32
    %c0_i32_1 = arith.constant 0 : i32
    return %c0_i32, %c0_i32_0 : i32, i32
  }
  func.func @transform_9(%arg0: i32, %arg1: i32) -> (i32, i32, i32) {
    %c0_i32 = arith.constant 0 : i32
    %c0_i32_0 = arith.constant 0 : i32
    %c0_i32_1 = arith.constant 0 : i32
    return %arg0, %c0_i32, %c0_i32_0 : i32, i32, i32
  }
}

</mosaic_0001>

<llo_original>
// kernel: tpu_custom_call.1
$region0: #{tpu_custom_call.1}
  #allocation0 [shape = 'u32[]', space=smem, size = 0x4, offset = 0x4, fixed_abs, tag = 'smem constant byte address 0x4 - core index']
  #allocation1 [shape = 'u32[144,128]{1,0:T(1,128)}', space=vmem, size = 0x12000, scoped, tag = 'internal scratch']
  #allocation2 [shape = 'f32[1,64]{1,0:T(1,128)}', space=vmem, size = 0x200, scoped, tag = 'scratch operand']
  %s0 = inlined_call_operand.hbm [shape: f32[2,16,32], index: 0, kind: input, shape index: {}]
  %s1 = inlined_call_operand.hbm [shape: bf16[32,64], index: 1, kind: input, shape index: {}]
  %s2 = inlined_call_operand.vmem [shape: f32[1,64], index: 2, kind: input, shape index: {}]
  %s3 = inlined_call_operand.hbm [shape: bf16[6,64,64], index: 3, kind: input, shape index: {}]
  %s4 = inlined_call_operand.vmem [shape: f32[6,64], index: 4, kind: input, shape index: {}]
  %s5 = inlined_call_operand.hbm [shape: bf16[2,64,64], index: 5, kind: input, shape index: {}]
  %s6 = inlined_call_operand.vmem [shape: f32[2,64], index: 6, kind: input, shape index: {}]
  %s7 = inlined_call_operand.hbm [shape: bf16[64,128], index: 7, kind: input, shape index: {}]
  %s8 = inlined_call_operand.vmem [shape: f32[1,128], index: 8, kind: input, shape index: {}]
  %s9 = inlined_call_operand.hbm [shape: f32[2,1,128], index: 9, kind: output, shape index: {}]
  %s10 = sld [smem:[#allocation0]]
  $region97: #{tpu_custom_call.1} parent=0
    _
  %s12 = ssub.s32 1, %s10
  %s13 = scalar_select 0, %s12, %s10
  $region1: #{tpu_custom_call.1} parent=0
    #allocation3 [shape = 'u8[16384]{0}', space=vmem, size = 0x4000, scoped, tag = 'input window, operand 0']
    #allocation4 [shape = 's32[2]{0}', space=sflag, size = 0x8, scoped, tag = 'scoped memory for tpu_custom_call.1']
    #allocation5 [shape = 's32[2]{0}', space=sflag, size = 0x8, scoped, tag = 'scoped memory for tpu_custom_call.1']
    #allocation6 [shape = 'u8[8192]{0}', space=vmem, size = 0x2000, scoped, tag = 'input window, operand 1, single buffered']
    #allocation7 [shape = 's32[1]{0}', space=sflag, size = 0x4, scoped, tag = 'scoped memory for tpu_custom_call.1']
    #allocation8 [shape = 'u8[98304]{0}', space=vmem, size = 0x18000, scoped, tag = 'input window, operand 3, single buffered']
    #allocation9 [shape = 'u8[32768]{0}', space=vmem, size = 0x8000, scoped, tag = 'input window, operand 5, single buffered']
    #allocation10 [shape = 's32[1]{0}', space=sflag, size = 0x4, scoped, tag = 'scoped memory for tpu_custom_call.1']
    #allocation11 [shape = 'u8[16384]{0}', space=vmem, size = 0x4000, scoped, tag = 'input window, operand 7, single buffered']
    #allocation12 [shape = 'u8[1024]{0}', space=vmem, size = 0x400, scoped, tag = 'output window, operand 0']
    %14 = vsyncpa [#allocation4], 0
    %s15 = scalar_lea.sflag [#allocation4], 1
    %16 = vsyncpa %s15, 0
    %17 = vsyncpa [#allocation7], 0
    %18 = vsyncpa [#allocation10], 0
    %19 = vsyncpa [#allocation5], 0
    %s20 = scalar_lea.sflag [#allocation5], 1
    %21 = vsyncpa %s20, 0
    loop: start=0, step=1, limit=4
    $region2: #{tpu_custom_call.1} parent=1 // loop_pre_header
      _
    $region3: #{tpu_custom_call.1} parent=1 // loop_header
      %s23 = sphi 0, %s27
      %p24 = scmp.ge.s32.totalorder %s23, 4
      %s30 = sphi 0, %s42
      %s31 = sphi 0, %s38
      %s32 = sphi 0, %s30
      %s33 = sphi 0, %s31
      %s34 = sphi 0, %s32
      %s35 = sphi 0, %s33
      %s47 = sphi 0, %s49
      %s50 = sphi 0, %s47
      %s51 = sphi 0, %s50
      %s67 = sphi 0, %s51
      %s71 = sphi 0, %s71
      %s73 = sphi 0, %s71
      %s74 = sphi 0, %s73
      %s88 = sphi 0, %s74
      %s92 = sphi 0, %s92
      %s94 = sphi 0, %s92
      %s95 = sphi 0, %s94
      %s109 = sphi 0, %s95
      %s113 = sphi 0, %s113
      %s115 = sphi 0, %s113
      %s116 = sphi 0, %s115
      %s130 = sphi 0, %s116
      %s134 = sphi 0, %s134
      %s136 = sphi 0, %s134
      %s137 = sphi 0, %s136
      %s151 = sphi 0, %s137
      %s155 = sphi 0, %s155
      %s157 = sphi 0, %s155
      %s158 = sphi 0, %s157
      %s172 = sphi 0, %s158
      %s176 = sphi 0, %s176
      %s178 = sphi 0, %s176
      %s179 = sphi 0, %s178
      %s193 = sphi 0, %s179
      %s197 = sphi 0, %s197
      %s199 = sphi 0, %s197
      %s200 = sphi 0, %s199
      %s214 = sphi 0, %s200
      %s218 = sphi 0, %s218
      %s220 = sphi 0, %s218
      %s221 = sphi 0, %s220
      %s235 = sphi 0, %s221
      %s241 = sphi 0, %s243
      %s244 = sphi 0, %s241
      %s245 = sphi 0, %s244
      %s261 = sphi 0, %s245
    $region4: #{tpu_custom_call.1} parent=1 // loop_header_branch
      %26 = sbr.rel (%p24) target = $region8
    $region5: #{tpu_custom_call.1} parent=1 // loop_body
      %s28 = ssub.s32 %s23, 1
      %s29 = ssub.s32 %s23, 2
      %s36 = sadd.s32 1, %s31
      %p37 = scmp.ge.s32.totalorder %s36, 1
      %s38 = scalar_select %p37, 0, %s36
      %s39 = sadd.s32 1, %s30
      %s40 = scalar_select %p37, %s39, %s30
      %p41 = scmp.ge.s32.totalorder %s40, 2
      %s42 = scalar_select %p41, 0, %s40
      %s43 = ssub.s32 %s30, %s42
      %s44 = ssub.s32 %s31, %s38
      %s45 = sor.u32 %s43, %s44
      %p46 = scmp.eq.s32.totalorder %s45, 0
      %s48 = sadd.s32 %s47, 1
      %s49 = scalar_select %p46, %s47, %s48
      %p52 = pneg %p46
      %p53 = scmp.eq.s32.totalorder %s23, 1
      %p54 = por %p52, %p53
      %p55 = scmp.ne.s32.totalorder %s47, %s50
      %p56 = scmp.eq.s32.totalorder %s23, 0
      %p57 = por %p55, %p56
      %p58 = scmp.ne.s32.totalorder %s47, %s50
      %p59 = scmp.eq.s32.totalorder %s28, 1
      %p60 = por %p58, %p59
      %p61 = scmp.ne.s32.totalorder %s50, %s51
      %p62 = scmp.eq.s32.totalorder %s28, 0
      %p63 = por %p61, %p62
      %p64 = scmp.ne.s32.totalorder %s50, %s51
      %p65 = scmp.eq.s32.totalorder %s29, 1
      %p66 = por %p64, %p65
      %p68 = scmp.ne.s32.totalorder %s51, %s67
      %p69 = scmp.eq.s32.totalorder %s29, 0
      %p70 = por %p68, %p69
      %s72 = sadd.s32 %s71, 1
      %p75 = scmp.eq.s32.totalorder %s23, 1
      %p76 = scmp.ne.s32.totalorder %s71, %s73
      %p77 = scmp.eq.s32.totalorder %s23, 0
      %p78 = por %p76, %p77
      %p79 = scmp.ne.s32.totalorder %s71, %s73
      %p80 = scmp.eq.s32.totalorder %s28, 1
      %p81 = por %p79, %p80
      %p82 = scmp.ne.s32.totalorder %s73, %s74
      %p83 = scmp.eq.s32.totalorder %s28, 0
      %p84 = por %p82, %p83
      %p85 = scmp.ne.s32.totalorder %s73, %s74
      %p86 = scmp.eq.s32.totalorder %s29, 1
      %p87 = por %p85, %p86
      %p89 = scmp.ne.s32.totalorder %s74, %s88
      %p90 = scmp.eq.s32.totalorder %s29, 0
      %p91 = por %p89, %p90
      %s93 = sadd.s32 %s92, 1
      %p96 = scmp.eq.s32.totalorder %s23, 1
      %p97 = scmp.ne.s32.totalorder %s92, %s94
      %p98 = scmp.eq.s32.totalorder %s23, 0
      %p99 = por %p97, %p98
      %p100 = scmp.ne.s32.totalorder %s92, %s94
      %p101 = scmp.eq.s32.totalorder %s28, 1
      %p102 = por %p100, %p101
      %p103 = scmp.ne.s32.totalorder %s94, %s95
      %p104 = scmp.eq.s32.totalorder %s28, 0
      %p105 = por %p103, %p104
      %p106 = scmp.ne.s32.totalorder %s94, %s95
      %p107 = scmp.eq.s32.totalorder %s29, 1
      %p108 = por %p106, %p107
      %p110 = scmp.ne.s32.totalorder %s95, %s109
      %p111 = scmp.eq.s32.totalorder %s29, 0
      %p112 = por %p110, %p111
      %s114 = sadd.s32 %s113, 1
      %p117 = scmp.eq.s32.totalorder %s23, 1
      %p118 = scmp.ne.s32.totalorder %s113, %s115
      %p119 = scmp.eq.s32.totalorder %s23, 0
      %p120 = por %p118, %p119
      %p121 = scmp.ne.s32.totalorder %s113, %s115
      %p122 = scmp.eq.s32.totalorder %s28, 1
      %p123 = por %p121, %p122
      %p124 = scmp.ne.s32.totalorder %s115, %s116
      %p125 = scmp.eq.s32.totalorder %s28, 0
      %p126 = por %p124, %p125
      %p127 = scmp.ne.s32.totalorder %s115, %s116
      %p128 = scmp.eq.s32.totalorder %s29, 1
      %p129 = por %p127, %p128
      %p131 = scmp.ne.s32.totalorder %s116, %s130
      %p132 = scmp.eq.s32.totalorder %s29, 0
      %p133 = por %p131, %p132
      %s135 = sadd.s32 %s134, 1
      %p138 = scmp.eq.s32.totalorder %s23, 1
      %p139 = scmp.ne.s32.totalorder %s134, %s136
      %p140 = scmp.eq.s32.totalorder %s23, 0
      %p141 = por %p139, %p140
      %p142 = scmp.ne.s32.totalorder %s134, %s136
      %p143 = scmp.eq.s32.totalorder %s28, 1
      %p144 = por %p142, %p143
      %p145 = scmp.ne.s32.totalorder %s136, %s137
      %p146 = scmp.eq.s32.totalorder %s28, 0
      %p147 = por %p145, %p146
      %p148 = scmp.ne.s32.totalorder %s136, %s137
      %p149 = scmp.eq.s32.totalorder %s29, 1
      %p150 = por %p148, %p149
      %p152 = scmp.ne.s32.totalorder %s137, %s151
      %p153 = scmp.eq.s32.totalorder %s29, 0
      %p154 = por %p152, %p153
      %s156 = sadd.s32 %s155, 1
      %p159 = scmp.eq.s32.totalorder %s23, 1
      %p160 = scmp.ne.s32.totalorder %s155, %s157
      %p161 = scmp.eq.s32.totalorder %s23, 0
      %p162 = por %p160, %p161
      %p163 = scmp.ne.s32.totalorder %s155, %s157
      %p164 = scmp.eq.s32.totalorder %s28, 1
      %p165 = por %p163, %p164
      %p166 = scmp.ne.s32.totalorder %s157, %s158
      %p167 = scmp.eq.s32.totalorder %s28, 0
      %p168 = por %p166, %p167
      %p169 = scmp.ne.s32.totalorder %s157, %s158
      %p170 = scmp.eq.s32.totalorder %s29, 1
      %p171 = por %p169, %p170
      %p173 = scmp.ne.s32.totalorder %s158, %s172
      %p174 = scmp.eq.s32.totalorder %s29, 0
      %p175 = por %p173, %p174
      %s177 = sadd.s32 %s176, 1
      %p180 = scmp.eq.s32.totalorder %s23, 1
      %p181 = scmp.ne.s32.totalorder %s176, %s178
      %p182 = scmp.eq.s32.totalorder %s23, 0
      %p183 = por %p181, %p182
      %p184 = scmp.ne.s32.totalorder %s176, %s178
      %p185 = scmp.eq.s32.totalorder %s28, 1
      %p186 = por %p184, %p185
      %p187 = scmp.ne.s32.totalorder %s178, %s179
      %p188 = scmp.eq.s32.totalorder %s28, 0
      %p189 = por %p187, %p188
      %p190 = scmp.ne.s32.totalorder %s178, %s179
      %p191 = scmp.eq.s32.totalorder %s29, 1
      %p192 = por %p190, %p191
      %p194 = scmp.ne.s32.totalorder %s179, %s193
      %p195 = scmp.eq.s32.totalorder %s29, 0
      %p196 = por %p194, %p195
      %s198 = sadd.s32 %s197, 1
      %p201 = scmp.eq.s32.totalorder %s23, 1
      %p202 = scmp.ne.s32.totalorder %s197, %s199
      %p203 = scmp.eq.s32.totalorder %s23, 0
      %p204 = por %p202, %p203
      %p205 = scmp.ne.s32.totalorder %s197, %s199
      %p206 = scmp.eq.s32.totalorder %s28, 1
      %p207 = por %p205, %p206
      %p208 = scmp.ne.s32.totalorder %s199, %s200
      %p209 = scmp.eq.s32.totalorder %s28, 0
      %p210 = por %p208, %p209
      %p211 = scmp.ne.s32.totalorder %s199, %s200
      %p212 = scmp.eq.s32.totalorder %s29, 1
      %p213 = por %p211, %p212
      %p215 = scmp.ne.s32.totalorder %s200, %s214
      %p216 = scmp.eq.s32.totalorder %s29, 0
      %p217 = por %p215, %p216
      %s219 = sadd.s32 %s218, 1
      %p222 = scmp.eq.s32.totalorder %s23, 1
      %p223 = scmp.ne.s32.totalorder %s218, %s220
      %p224 = scmp.eq.s32.totalorder %s23, 0
      %p225 = por %p223, %p224
      %p226 = scmp.ne.s32.totalorder %s218, %s220
      %p227 = scmp.eq.s32.totalorder %s28, 1
      %p228 = por %p226, %p227
      %p229 = scmp.ne.s32.totalorder %s220, %s221
      %p230 = scmp.eq.s32.totalorder %s28, 0
      %p231 = por %p229, %p230
      %p232 = scmp.ne.s32.totalorder %s220, %s221
      %p233 = scmp.eq.s32.totalorder %s29, 1
      %p234 = por %p232, %p233
      %p236 = scmp.ne.s32.totalorder %s221, %s235
      %p237 = scmp.eq.s32.totalorder %s29, 0
      %p238 = por %p236, %p237
      %s239 = ssub.s32 %s30, %s42
      %p240 = scmp.eq.s32.totalorder %s239, 0
      %s242 = sadd.s32 %s241, 1
      %s243 = scalar_select %p240, %s241, %s242
      %p246 = pneg %p240
      %p247 = scmp.eq.s32.totalorder %s23, 1
      %p248 = por %p246, %p247
      %p249 = scmp.ne.s32.totalorder %s241, %s244
      %p250 = scmp.eq.s32.totalorder %s23, 0
      %p251 = por %p249, %p250
      %p252 = scmp.ne.s32.totalorder %s241, %s244
      %p253 = scmp.eq.s32.totalorder %s28, 1
      %p254 = por %p252, %p253
      %p255 = scmp.ne.s32.totalorder %s244, %s245
      %p256 = scmp.eq.s32.totalorder %s28, 0
      %p257 = por %p255, %p256
      %p258 = scmp.ne.s32.totalorder %s244, %s245
      %p259 = scmp.eq.s32.totalorder %s29, 1
      %p260 = por %p258, %p259
      %p262 = scmp.ne.s32.totalorder %s245, %s261
      %p263 = scmp.eq.s32.totalorder %s29, 0
      %p264 = por %p262, %p263
      %p265 = scmp.le.s32.totalorder 1, %s23
      %p266 = scmp.lt.s32.totalorder %s23, 3
      %p267 = pnand %p265, %p266
      %p268 = pneg %p267
      // Predicated region
      $region9: #{tpu_custom_call.1} parent=5 // pred_check
        _
      $region10: #{tpu_custom_call.1} parent=5 // pred_check_branch
        %270 = sbr.rel (%p267) target = $region12
      $region11: #{tpu_custom_call.1} parent=5 // pred_region
        %s271 = ssub.s32 %s23, 1
        // Predicated region
        $region13: #{tpu_custom_call.1} parent=11 // pred_check
          %p272 = pneg %p84
        $region14: #{tpu_custom_call.1} parent=11 // pred_check_branch
          %274 = sbr.rel (%p272) target = $region16
        $region15: #{tpu_custom_call.1} parent=11 // pred_region
          %s276 = ssub.s32 256, 256
          %277 = vsyncadd [#allocation7], %s276
          %s278 = sshll.u32 [#allocation6], 4
          %s279 = int_to_ptr.vmem [resolvable:$true] %s278
          %284 = dma.hbm_to_vmem [thread:$0]  %s1, 256, %s279, [#allocation7], 64, 64, 4
        $region16: #{tpu_custom_call.1} parent=11 // pred_fallthru
          _
        // Predicated region
        $region17: #{tpu_custom_call.1} parent=11 // pred_check
          %p285 = pneg %p105
        $region18: #{tpu_custom_call.1} parent=11 // pred_check_branch
          %287 = sbr.rel (%p285) target = $region20
        $region19: #{tpu_custom_call.1} parent=11 // pred_region
          _
        $region20: #{tpu_custom_call.1} parent=11 // pred_fallthru
          _
        // Predicated region
        $region21: #{tpu_custom_call.1} parent=11 // pred_check
          %p288 = pneg %p126
        $region22: #{tpu_custom_call.1} parent=11 // pred_check_branch
          %290 = sbr.rel (%p288) target = $region24
        $region23: #{tpu_custom_call.1} parent=11 // pred_region
          %s292 = ssub.s32 3072, 3072
          %293 = vsyncadd [#allocation7], %s292
          %s294 = sshll.u32 [#allocation8], 4
          %s295 = int_to_ptr.vmem [resolvable:$true] %s294
          %300 = dma.hbm_to_vmem [thread:$0]  %s3, 3072, %s295, [#allocation7], 64, 64, 4
        $region24: #{tpu_custom_call.1} parent=11 // pred_fallthru
          _
        // Predicated region
        $region25: #{tpu_custom_call.1} parent=11 // pred_check
          %p301 = pneg %p147
        $region26: #{tpu_custom_call.1} parent=11 // pred_check_branch
          %303 = sbr.rel (%p301) target = $region28
        $region27: #{tpu_custom_call.1} parent=11 // pred_region
          _
        $region28: #{tpu_custom_call.1} parent=11 // pred_fallthru
          _
        // Predicated region
        $region29: #{tpu_custom_call.1} parent=11 // pred_check
          %p304 = pneg %p168
        $region30: #{tpu_custom_call.1} parent=11 // pred_check_branch
          %306 = sbr.rel (%p304) target = $region32
        $region31: #{tpu_custom_call.1} parent=11 // pred_region
          %s308 = ssub.s32 1024, 1024
          %309 = vsyncadd [#allocation10], %s308
          %s310 = sshll.u32 [#allocation9], 4
          %s311 = int_to_ptr.vmem [resolvable:$true] %s310
          %316 = dma.hbm_to_vmem [thread:$0]  %s5, 1024, %s311, [#allocation10], 64, 64, 4
        $region32: #{tpu_custom_call.1} parent=11 // pred_fallthru
          _
        // Predicated region
        $region33: #{tpu_custom_call.1} parent=11 // pred_check
          %p317 = pneg %p189
        $region34: #{tpu_custom_call.1} parent=11 // pred_check_branch
          %319 = sbr.rel (%p317) target = $region36
        $region35: #{tpu_custom_call.1} parent=11 // pred_region
          _
        $region36: #{tpu_custom_call.1} parent=11 // pred_fallthru
          _
        // Predicated region
        $region37: #{tpu_custom_call.1} parent=11 // pred_check
          %p320 = pneg %p210
        $region38: #{tpu_custom_call.1} parent=11 // pred_check_branch
          %322 = sbr.rel (%p320) target = $region40
        $region39: #{tpu_custom_call.1} parent=11 // pred_region
          %s324 = ssub.s32 512, 512
          %325 = vsyncadd [#allocation10], %s324
          %s326 = sshll.u32 [#allocation11], 4
          %s327 = int_to_ptr.vmem [resolvable:$true] %s326
          %332 = dma.hbm_to_vmem [thread:$0]  %s7, 512, %s327, [#allocation10], 64, 64, 4
        $region40: #{tpu_custom_call.1} parent=11 // pred_fallthru
          _
        // Predicated region
        $region41: #{tpu_custom_call.1} parent=11 // pred_check
          %p333 = pneg %p231
        $region42: #{tpu_custom_call.1} parent=11 // pred_check_branch
          %335 = sbr.rel (%p333) target = $region44
        $region43: #{tpu_custom_call.1} parent=11 // pred_region
          _
        $region44: #{tpu_custom_call.1} parent=11 // pred_fallthru
          _
      $region12: #{tpu_custom_call.1} parent=5 // pred_fallthru
        _
      %p336 = scmp.lt.s32.totalorder %s23, 2
      // Predicated region
      $region45: #{tpu_custom_call.1} parent=5 // pred_check
        %p337 = pneg %p336
      $region46: #{tpu_custom_call.1} parent=5 // pred_check_branch
        %339 = sbr.rel (%p337) target = $region48
      $region47: #{tpu_custom_call.1} parent=5 // pred_region
        // Predicated region
        $region49: #{tpu_custom_call.1} parent=47 // pred_check
          %p340 = pneg %p57
        $region50: #{tpu_custom_call.1} parent=47 // pred_check_branch
          %342 = sbr.rel (%p340) target = $region52
        $region51: #{tpu_custom_call.1} parent=47 // pred_region
          %s343 = sand.u32 %s47, 1
          %s344 = scalar_lea.sflag [#allocation4], %s343
          %s345 = sand.u32 %s47, 1
          %s346 = smul.addr %s345, 16
          %s347 = scalar_lea.vmem [#allocation3], %s346
          %s348 = smul.u32 2, %s31
          %s350 = ssub.s32 256, 256
          %351 = vsyncadd %s344, %s350
          %s352 = smul.addr %s30, 2
          %s353 = sadd.s32 %s348, %s352
          %s354 = smul.addr %s353, 128
          %s355 = scalar_lea.hbm %s0, %s354
          %s356 = sshll.u32 %s347, 4
          %s357 = int_to_ptr.vmem [resolvable:$true] %s356
          %362 = dma.hbm_to_vmem [thread:$0]  %s355, 256, %s357, %s344, 128, 128, 8
        $region52: #{tpu_custom_call.1} parent=47 // pred_fallthru
          _
      $region48: #{tpu_custom_call.1} parent=5 // pred_fallthru
        _
      %p363 = scmp.le.s32.totalorder 1, %s23
      %p364 = scmp.lt.s32.totalorder %s23, 3
      %p365 = pnand %p363, %p364
      %p366 = pneg %p365
      // Predicated region
      $region53: #{tpu_custom_call.1} parent=5 // pred_check
        _
      $region54: #{tpu_custom_call.1} parent=5 // pred_check_branch
        %368 = sbr.rel (%p365) target = $region56
      $region55: #{tpu_custom_call.1} parent=5 // pred_region
        %s369 = ssub.s32 %s23, 1
        %s370 = sand.u32 %s50, 1
        %s371 = scalar_lea.sflag [#allocation4], %s370
        %s372 = sand.u32 %s50, 1
        %s373 = smul.addr %s372, 16
        %s374 = scalar_lea.vmem [#allocation3], %s373
        // Predicated region
        $region57: #{tpu_custom_call.1} parent=55 // pred_check
          %p375 = pneg %p63
        $region58: #{tpu_custom_call.1} parent=55 // pred_check_branch
          %377 = sbr.rel (%p375) target = $region60
        $region59: #{tpu_custom_call.1} parent=55 // pred_region
          %378 = dma.done %s371, 256
        $region60: #{tpu_custom_call.1} parent=55 // pred_fallthru
          _
        // Predicated region
        $region61: #{tpu_custom_call.1} parent=55 // pred_check
          %p379 = pneg %p84
        $region62: #{tpu_custom_call.1} parent=55 // pred_check_branch
          %381 = sbr.rel (%p379) target = $region64
        $region63: #{tpu_custom_call.1} parent=55 // pred_region
          %382 = dma.done [#allocation7], 256
        $region64: #{tpu_custom_call.1} parent=55 // pred_fallthru
          _
        // Predicated region
        $region65: #{tpu_custom_call.1} parent=55 // pred_check
          %p383 = pneg %p126
        $region66: #{tpu_custom_call.1} parent=55 // pred_check_branch
          %385 = sbr.rel (%p383) target = $region68
        $region67: #{tpu_custom_call.1} parent=55 // pred_region
          %386 = dma.done [#allocation7], 3072
        $region68: #{tpu_custom_call.1} parent=55 // pred_fallthru
          _
        // Predicated region
        $region69: #{tpu_custom_call.1} parent=55 // pred_check
          %p387 = pneg %p168
        $region70: #{tpu_custom_call.1} parent=55 // pred_check_branch
          %389 = sbr.rel (%p387) target = $region72
        $region71: #{tpu_custom_call.1} parent=55 // pred_region
          %390 = dma.done [#allocation10], 1024
        $region72: #{tpu_custom_call.1} parent=55 // pred_fallthru
          _
        // Predicated region
        $region73: #{tpu_custom_call.1} parent=55 // pred_check
          %p391 = pneg %p210
        $region74: #{tpu_custom_call.1} parent=55 // pred_check_branch
          %393 = sbr.rel (%p391) target = $region76
        $region75: #{tpu_custom_call.1} parent=55 // pred_region
          %394 = dma.done [#allocation10], 512
        $region76: #{tpu_custom_call.1} parent=55 // pred_fallthru
          _
        %s395 = sand.u32 %s50, 1
        %s396 = scalar_lea.sflag [#allocation4], %s395
        %s397 = sand.u32 %s50, 1
        %s398 = smul.addr %s397, 16
        %s399 = scalar_lea.vmem [#allocation3], %s398
        %p400 = pneg %p63
        %p401 = pneg %p60
        %p402 = pneg %p84
        %p403 = pneg %p81
        %p404 = pneg %p105
        %p405 = pneg %p102
        %p406 = pneg %p126
        %p407 = pneg %p123
        %p408 = pneg %p147
        %p409 = pneg %p144
        %p410 = pneg %p168
        %p411 = pneg %p165
        %p412 = pneg %p189
        %p413 = pneg %p186
        %p414 = pneg %p210
        %p415 = pneg %p207
        %p416 = pneg %p231
        %p417 = pneg %p228
        %p418 = pneg %p257
        %p419 = pneg %p254
        %s420 = sand.u32 %s244, 1
        %s421 = scalar_lea.sflag [#allocation5], %s420
        %s422 = sand.u32 %s244, 1
        %s423 = scalar_lea.vmem [#allocation12], %s422
        %s424 = smul.u32 2, %s33
        %p426 = scmp.eq.s32.totalorder %s33, 0
        // Predicated region
        $region77: #{tpu_custom_call.1} parent=55 // pred_check
          %p427 = pneg %p426
        $region78: #{tpu_custom_call.1} parent=55 // pred_check_branch
          %429 = sbr.rel (%p427) target = $region80
        $region79: #{tpu_custom_call.1} parent=55 // pred_region
          %vm430 = vcmask 516096
          %431 = vst.msk [vmem:[#allocation2] sm:$0x1] %vm430, 0.0
        $region80: #{tpu_custom_call.1} parent=55 // pred_fallthru
          _
        %v432 = vld [vmem:[%s374] sm:$0xff]
        %v433 = vld [vmem:[%s374 + $0x8] sm:$0xff]
        %v434 = vpack.c.bf16 %v433, %v432
        %v435 = vld [vmem:[#allocation6] sm:$0xf]
        %v436 = vld [vmem:[#allocation6 + $0x4] sm:$0xf]
        %v437 = vld [vmem:[#allocation6 + $0x8] sm:$0xf]
        %v438 = vld [vmem:[#allocation6 + $0xc] sm:$0xf]
        %v439 = vld [vmem:[%s2] sm:$0x1]
        %v441 = vlaneseq
        %v442 = vshrl.u32 %v441, 7
        %v443 = vsub.s32 0, %v442
        %v444 = vrot.slane %v439, %v443
        %v450 = vunpack.c.l.b16 %v435
        %v451 = vunpack.c.l.b16 %v436
        %v452 = vunpack.c.l.b16 %v437
        %v453 = vunpack.c.l.b16 %v438
        %v454 = vpack.c.b16 %v451, %v450
        %v455 = vpack.c.b16 %v453, %v452
        %vm458 = vcmask 261120
        %v460 = vsel %vm458, %v434, 0
        %462 = vmatprep.subr.bf16.mxu0 0
        %463 = vmatpush1.bf16.msra.mxu0 %v454
        %464 = vmatprep.subr.bf16.mxu0 0
        %465 = vmatpush1.bf16.msra.mxu0 %v455
        %466 = vmatprep.subr.bf16.mxu0 0
        %467 = vmatpush1.bf16.msra.mxu0 0
        %468 = vmatprep.subr.bf16.mxu0 0
        %469 = vmatpush1.bf16.msra.mxu0 0
        %470 = vmatprep.subr.bf16.mxu0 0
        %471 = vmatpush1.bf16.msra.mxu0 0
        %472 = vmatprep.subr.bf16.mxu0 0
        %473 = vmatpush1.bf16.msra.mxu0 0
        %474 = vmatprep.subr.bf16.mxu0 0
        %475 = vmatpush1.bf16.msra.mxu0 0
        %476 = vmatprep.subr.bf16.mxu0 0
        %477 = vmatpush1.bf16.msra.mxu0 0
        %478 = vmatprep.subr.bf16.mxu0 0
        %479 = vmatpush1.bf16.msra.mxu0 0
        %480 = vmatprep.subr.bf16.mxu0 0
        %481 = vmatpush1.bf16.msra.mxu0 0
        %482 = vmatprep.subr.bf16.mxu0 0
        %483 = vmatpush1.bf16.msra.mxu0 0
        %484 = vmatprep.subr.bf16.mxu0 0
        %485 = vmatpush1.bf16.msra.mxu0 0
        %486 = vmatprep.subr.bf16.mxu0 0
        %487 = vmatpush1.bf16.msra.mxu0 0
        %488 = vmatprep.subr.bf16.mxu0 0
        %489 = vmatpush1.bf16.msra.mxu0 0
        %490 = vmatprep.subr.bf16.mxu0 0
        %491 = vmatpush1.bf16.msra.mxu0 0
        %492 = vmatprep.subr.bf16.mxu0 0
        %493 = vmatpush1.bf16.msra.mxu0 0
        %494 = vmatprep.mubr.bf16.mxu0 0
        %495 = vmatmul.mubr.bf16.gmra.mrb[0].mxu0 %v460
        %v496 = vpop.f32.mrb[0].mxu0
        %v497 = vadd.f32 %v444, %v496
        %v498 = vpop.f32.mrb[0].mxu0
        %v499 = vpop.f32.mrb[0].mxu0
        %v500 = vadd.f32 %v444, %v499
        %v501 = vpop.f32.mrb[0].mxu0
        %502 = vdwg.mxu0
        %v503 = vpack.c.bf16 %v500, %v497
        %v504 = vld [vmem:[#allocation8] sm:$0xf]
        %v505 = vld [vmem:[#allocation8 + $0x4] sm:$0xf]
        %v506 = vld [vmem:[#allocation8 + $0x8] sm:$0xf]
        %v507 = vld [vmem:[#allocation8 + $0xc] sm:$0xf]
        %v508 = vld [vmem:[#allocation8 + $0x10] sm:$0xf]
        %v509 = vld [vmem:[#allocation8 + $0x14] sm:$0xf]
        %v510 = vld [vmem:[#allocation8 + $0x18] sm:$0xf]
        %v511 = vld [vmem:[#allocation8 + $0x1c] sm:$0xf]
        %v512 = vld [vmem:[%s4] sm:$0x1]
        %v513 = vlaneseq
        %v514 = vshrl.u32 %v513, 7
        %v515 = vsub.s32 0, %v514
        %v516 = vrot.slane %v512, %v515
        %v525 = vunpack.c.l.b16 %v504
        %v526 = vunpack.c.l.b16 %v505
        %v527 = vunpack.c.l.b16 %v506
        %v528 = vunpack.c.l.b16 %v507
        %v529 = vunpack.c.l.b16 %v508
        %v530 = vunpack.c.l.b16 %v509
        %v531 = vunpack.c.l.b16 %v510
        %v532 = vunpack.c.l.b16 %v511
        %v533 = vpack.c.b16 %v526, %v525
        %v534 = vpack.c.b16 %v528, %v527
        %v535 = vpack.c.b16 %v530, %v529
        %v536 = vpack.c.b16 %v532, %v531
        %vm541 = vcmask 523264
        %v543 = vsel %vm541, %v503, 0
        %545 = vmatprep.subr.bf16.mxu0 0
        %546 = vmatpush1.bf16.msra.mxu0 %v533
        %547 = vmatprep.subr.bf16.mxu0 0
        %548 = vmatpush1.bf16.msra.mxu0 %v534
        %549 = vmatprep.subr.bf16.mxu0 0
        %550 = vmatpush1.bf16.msra.mxu0 %v535
        %551 = vmatprep.subr.bf16.mxu0 0
        %552 = vmatpush1.bf16.msra.mxu0 %v536
        %553 = vmatprep.subr.bf16.mxu0 0
        %554 = vmatpush1.bf16.msra.mxu0 0
        %555 = vmatprep.subr.bf16.mxu0 0
        %556 = vmatpush1.bf16.msra.mxu0 0
        %557 = vmatprep.subr.bf16.mxu0 0
        %558 = vmatpush1.bf16.msra.mxu0 0
        %559 = vmatprep.subr.bf16.mxu0 0
        %560 = vmatpush1.bf16.msra.mxu0 0
        %561 = vmatprep.subr.bf16.mxu0 0
        %562 = vmatpush1.bf16.msra.mxu0 0
        %563 = vmatprep.subr.bf16.mxu0 0
        %564 = vmatpush1.bf16.msra.mxu0 0
        %565 = vmatprep.subr.bf16.mxu0 0
        %566 = vmatpush1.bf16.msra.mxu0 0
        %567 = vmatprep.subr.bf16.mxu0 0
        %568 = vmatpush1.bf16.msra.mxu0 0
        %569 = vmatprep.subr.bf16.mxu0 0
        %570 = vmatpush1.bf16.msra.mxu0 0
        %571 = vmatprep.subr.bf16.mxu0 0
        %572 = vmatpush1.bf16.msra.mxu0 0
        %573 = vmatprep.subr.bf16.mxu0 0
        %574 = vmatpush1.bf16.msra.mxu0 0
        %575 = vmatprep.subr.bf16.mxu0 0
        %576 = vmatpush1.bf16.msra.mxu0 0
        %577 = vmatprep.mubr.bf16.mxu0 0
        %578 = vmatmul.mubr.bf16.gmra.mrb[0].mxu0 %v543
        %v579 = vpop.f32.mrb[0].mxu0
        %v580 = vadd.f32 %v516, %v579
        %v581 = vpop.f32.mrb[0].mxu0
        %v582 = vpop.f32.mrb[0].mxu0
        %v583 = vadd.f32 %v516, %v582
        %v584 = vpop.f32.mrb[0].mxu0
        %585 = vdwg.mxu0
        %v586 = vmax.f32 %v580, 0.0
        %v587 = vmax.f32 %v583, 0.0
        %v588 = vpack.c.bf16 %v587, %v586
        %s589 = scalar_lea.vmem [#allocation8], 32
        %v590 = vld [vmem:[%s589] sm:$0xf]
        %v591 = vld [vmem:[%s589 + $0x4] sm:$0xf]
        %v592 = vld [vmem:[%s589 + $0x8] sm:$0xf]
        %v593 = vld [vmem:[%s589 + $0xc] sm:$0xf]
        %v594 = vld [vmem:[%s589 + $0x10] sm:$0xf]
        %v595 = vld [vmem:[%s589 + $0x14] sm:$0xf]
        %v596 = vld [vmem:[%s589 + $0x18] sm:$0xf]
        %v597 = vld [vmem:[%s589 + $0x1c] sm:$0xf]
        %v598 = vld [vmem:[%s4 + $0x1] sm:$0x1]
        %v599 = vlaneseq
        %v600 = vshrl.u32 %v599, 7
        %v601 = vsub.s32 0, %v600
        %v602 = vrot.slane %v598, %v601
        %v611 = vunpack.c.l.b16 %v590
        %v612 = vunpack.c.l.b16 %v591
        %v613 = vunpack.c.l.b16 %v592
        %v614 = vunpack.c.l.b16 %v593
        %v615 = vunpack.c.l.b16 %v594
        %v616 = vunpack.c.l.b16 %v595
        %v617 = vunpack.c.l.b16 %v596
        %v618 = vunpack.c.l.b16 %v597
        %v619 = vpack.c.b16 %v612, %v611
        %v620 = vpack.c.b16 %v614, %v613
        %v621 = vpack.c.b16 %v616, %v615
        %v622 = vpack.c.b16 %v618, %v617
        %v628 = vsel %vm541, %v588, 0
        %630 = vmatprep.subr.bf16.mxu0 0
        %631 = vmatpush1.bf16.msra.mxu0 %v619
        %632 = vmatprep.subr.bf16.mxu0 0
        %633 = vmatpush1.bf16.msra.mxu0 %v620
        %634 = vmatprep.subr.bf16.mxu0 0
        %635 = vmatpush1.bf16.msra.mxu0 %v621
        %636 = vmatprep.subr.bf16.mxu0 0
        %637 = vmatpush1.bf16.msra.mxu0 %v622
        %638 = vmatprep.subr.bf16.mxu0 0
        %639 = vmatpush1.bf16.msra.mxu0 0
        %640 = vmatprep.subr.bf16.mxu0 0
        %641 = vmatpush1.bf16.msra.mxu0 0
        %642 = vmatprep.subr.bf16.mxu0 0
        %643 = vmatpush1.bf16.msra.mxu0 0
        %644 = vmatprep.subr.bf16.mxu0 0
        %645 = vmatpush1.bf16.msra.mxu0 0
        %646 = vmatprep.subr.bf16.mxu0 0
        %647 = vmatpush1.bf16.msra.mxu0 0
        %648 = vmatprep.subr.bf16.mxu0 0
        %649 = vmatpush1.bf16.msra.mxu0 0
        %650 = vmatprep.subr.bf16.mxu0 0
        %651 = vmatpush1.bf16.msra.mxu0 0
        %652 = vmatprep.subr.bf16.mxu0 0
        %653 = vmatpush1.bf16.msra.mxu0 0
        %654 = vmatprep.subr.bf16.mxu0 0
        %655 = vmatpush1.bf16.msra.mxu0 0
        %656 = vmatprep.subr.bf16.mxu0 0
        %657 = vmatpush1.bf16.msra.mxu0 0
        %658 = vmatprep.subr.bf16.mxu0 0
        %659 = vmatpush1.bf16.msra.mxu0 0
        %660 = vmatprep.subr.bf16.mxu0 0
        %661 = vmatpush1.bf16.msra.mxu0 0
        %662 = vmatprep.mubr.bf16.mxu0 0
        %663 = vmatmul.mubr.bf16.gmra.mrb[0].mxu0 %v628
        %v664 = vpop.f32.mrb[0].mxu0
        %v665 = vadd.f32 %v602, %v664
        %v666 = vpop.f32.mrb[0].mxu0
        %v667 = vpop.f32.mrb[0].mxu0
        %v668 = vadd.f32 %v602, %v667
        %v669 = vpop.f32.mrb[0].mxu0
        %670 = vdwg.mxu0
        %v671 = vmax.f32 %v665, 0.0
        %v672 = vmax.f32 %v668, 0.0
        %v673 = vpack.c.bf16 %v672, %v671
        %s674 = scalar_lea.vmem [#allocation8], 64
        %v675 = vld [vmem:[%s674] sm:$0xf]
        %v676 = vld [vmem:[%s674 + $0x4] sm:$0xf]
        %v677 = vld [vmem:[%s674 + $0x8] sm:$0xf]
        %v678 = vld [vmem:[%s674 + $0xc] sm:$0xf]
        %v679 = vld [vmem:[%s674 + $0x10] sm:$0xf]
        %v680 = vld [vmem:[%s674 + $0x14] sm:$0xf]
        %v681 = vld [vmem:[%s674 + $0x18] sm:$0xf]
        %v682 = vld [vmem:[%s674 + $0x1c] sm:$0xf]
        %v683 = vld [vmem:[%s4 + $0x2] sm:$0x1]
        %v684 = vlaneseq
        %v685 = vshrl.u32 %v684, 7
        %v686 = vsub.s32 0, %v685
        %v687 = vrot.slane %v683, %v686
        %v696 = vunpack.c.l.b16 %v675
        %v697 = vunpack.c.l.b16 %v676
        %v698 = vunpack.c.l.b16 %v677
        %v699 = vunpack.c.l.b16 %v678
        %v700 = vunpack.c.l.b16 %v679
        %v701 = vunpack.c.l.b16 %v680
        %v702 = vunpack.c.l.b16 %v681
        %v703 = vunpack.c.l.b16 %v682
        %v704 = vpack.c.b16 %v697, %v696
        %v705 = vpack.c.b16 %v699, %v698
        %v706 = vpack.c.b16 %v701, %v700
        %v707 = vpack.c.b16 %v703, %v702
        %v713 = vsel %vm541, %v673, 0
        %715 = vmatprep.subr.bf16.mxu0 0
        %716 = vmatpush1.bf16.msra.mxu0 %v704
        %717 = vmatprep.subr.bf16.mxu0 0
        %718 = vmatpush1.bf16.msra.mxu0 %v705
        %719 = vmatprep.subr.bf16.mxu0 0
        %720 = vmatpush1.bf16.msra.mxu0 %v706
        %721 = vmatprep.subr.bf16.mxu0 0
        %722 = vmatpush1.bf16.msra.mxu0 %v707
        %723 = vmatprep.subr.bf16.mxu0 0
        %724 = vmatpush1.bf16.msra.mxu0 0
        %725 = vmatprep.subr.bf16.mxu0 0
        %726 = vmatpush1.bf16.msra.mxu0 0
        %727 = vmatprep.subr.bf16.mxu0 0
        %728 = vmatpush1.bf16.msra.mxu0 0
        %729 = vmatprep.subr.bf16.mxu0 0
        %730 = vmatpush1.bf16.msra.mxu0 0
        %731 = vmatprep.subr.bf16.mxu0 0
        %732 = vmatpush1.bf16.msra.mxu0 0
        %733 = vmatprep.subr.bf16.mxu0 0
        %734 = vmatpush1.bf16.msra.mxu0 0
        %735 = vmatprep.subr.bf16.mxu0 0
        %736 = vmatpush1.bf16.msra.mxu0 0
        %737 = vmatprep.subr.bf16.mxu0 0
        %738 = vmatpush1.bf16.msra.mxu0 0
        %739 = vmatprep.subr.bf16.mxu0 0
        %740 = vmatpush1.bf16.msra.mxu0 0
        %741 = vmatprep.subr.bf16.mxu0 0
        %742 = vmatpush1.bf16.msra.mxu0 0
        %743 = vmatprep.subr.bf16.mxu0 0
        %744 = vmatpush1.bf16.msra.mxu0 0
        %745 = vmatprep.subr.bf16.mxu0 0
        %746 = vmatpush1.bf16.msra.mxu0 0
        %747 = vmatprep.mubr.bf16.mxu0 0
        %748 = vmatmul.mubr.bf16.gmra.mrb[0].mxu0 %v713
        %v749 = vpop.f32.mrb[0].mxu0
        %v750 = vadd.f32 %v687, %v749
        %v751 = vpop.f32.mrb[0].mxu0
        %v752 = vpop.f32.mrb[0].mxu0
        %v753 = vadd.f32 %v687, %v752
        %v754 = vpop.f32.mrb[0].mxu0
        %755 = vdwg.mxu0
        %v756 = vmax.f32 %v750, 0.0
        %v757 = vmax.f32 %v753, 0.0
        %v758 = vadd.f32 %v497, %v756
        %v759 = vadd.f32 %v500, %v757
        %v760 = vpack.c.bf16 %v759, %v758
        %s761 = scalar_lea.vmem [#allocation8], 96
        %v762 = vld [vmem:[%s761] sm:$0xf]
        %v763 = vld [vmem:[%s761 + $0x4] sm:$0xf]
        %v764 = vld [vmem:[%s761 + $0x8] sm:$0xf]
        %v765 = vld [vmem:[%s761 + $0xc] sm:$0xf]
        %v766 = vld [vmem:[%s761 + $0x10] sm:$0xf]
        %v767 = vld [vmem:[%s761 + $0x14] sm:$0xf]
        %v768 = vld [vmem:[%s761 + $0x18] sm:$0xf]
        %v769 = vld [vmem:[%s761 + $0x1c] sm:$0xf]
        %v770 = vld [vmem:[%s4 + $0x3] sm:$0x1]
        %v771 = vlaneseq
        %v772 = vshrl.u32 %v771, 7
        %v773 = vsub.s32 0, %v772
        %v774 = vrot.slane %v770, %v773
        %v783 = vunpack.c.l.b16 %v762
        %v784 = vunpack.c.l.b16 %v763
        %v785 = vunpack.c.l.b16 %v764
        %v786 = vunpack.c.l.b16 %v765
        %v787 = vunpack.c.l.b16 %v766
        %v788 = vunpack.c.l.b16 %v767
        %v789 = vunpack.c.l.b16 %v768
        %v790 = vunpack.c.l.b16 %v769
        %v791 = vpack.c.b16 %v784, %v783
        %v792 = vpack.c.b16 %v786, %v785
        %v793 = vpack.c.b16 %v788, %v787
        %v794 = vpack.c.b16 %v790, %v789
        %v800 = vsel %vm541, %v760, 0
        %802 = vmatprep.subr.bf16.mxu0 0
        %803 = vmatpush1.bf16.msra.mxu0 %v791
        %804 = vmatprep.subr.bf16.mxu0 0
        %805 = vmatpush1.bf16.msra.mxu0 %v792
        %806 = vmatprep.subr.bf16.mxu0 0
        %807 = vmatpush1.bf16.msra.mxu0 %v793
        %808 = vmatprep.subr.bf16.mxu0 0
        %809 = vmatpush1.bf16.msra.mxu0 %v794
        %810 = vmatprep.subr.bf16.mxu0 0
        %811 = vmatpush1.bf16.msra.mxu0 0
        %812 = vmatprep.subr.bf16.mxu0 0
        %813 = vmatpush1.bf16.msra.mxu0 0
        %814 = vmatprep.subr.bf16.mxu0 0
        %815 = vmatpush1.bf16.msra.mxu0 0
        %816 = vmatprep.subr.bf16.mxu0 0
        %817 = vmatpush1.bf16.msra.mxu0 0
        %818 = vmatprep.subr.bf16.mxu0 0
        %819 = vmatpush1.bf16.msra.mxu0 0
        %820 = vmatprep.subr.bf16.mxu0 0
        %821 = vmatpush1.bf16.msra.mxu0 0
        %822 = vmatprep.subr.bf16.mxu0 0
        %823 = vmatpush1.bf16.msra.mxu0 0
        %824 = vmatprep.subr.bf16.mxu0 0
        %825 = vmatpush1.bf16.msra.mxu0 0
        %826 = vmatprep.subr.bf16.mxu0 0
        %827 = vmatpush1.bf16.msra.mxu0 0
        %828 = vmatprep.subr.bf16.mxu0 0
        %829 = vmatpush1.bf16.msra.mxu0 0
        %830 = vmatprep.subr.bf16.mxu0 0
        %831 = vmatpush1.bf16.msra.mxu0 0
        %832 = vmatprep.subr.bf16.mxu0 0
        %833 = vmatpush1.bf16.msra.mxu0 0
        %834 = vmatprep.mubr.bf16.mxu0 0
        %835 = vmatmul.mubr.bf16.gmra.mrb[0].mxu0 %v800
        %v836 = vpop.f32.mrb[0].mxu0
        %v837 = vadd.f32 %v774, %v836
        %v838 = vpop.f32.mrb[0].mxu0
        %v839 = vpop.f32.mrb[0].mxu0
        %v840 = vadd.f32 %v774, %v839
        %v841 = vpop.f32.mrb[0].mxu0
        %842 = vdwg.mxu0
        %v843 = vmax.f32 %v837, 0.0
        %v844 = vmax.f32 %v840, 0.0
        %v845 = vpack.c.bf16 %v844, %v843
        %s846 = scalar_lea.vmem [#allocation8], 128
        %v847 = vld [vmem:[%s846] sm:$0xf]
        %v848 = vld [vmem:[%s846 + $0x4] sm:$0xf]
        %v849 = vld [vmem:[%s846 + $0x8] sm:$0xf]
        %v850 = vld [vmem:[%s846 + $0xc] sm:$0xf]
        %v851 = vld [vmem:[%s846 + $0x10] sm:$0xf]
        %v852 = vld [vmem:[%s846 + $0x14] sm:$0xf]
        %v853 = vld [vmem:[%s846 + $0x18] sm:$0xf]
        %v854 = vld [vmem:[%s846 + $0x1c] sm:$0xf]
        %v855 = vld [vmem:[%s4 + $0x4] sm:$0x1]
        %v856 = vlaneseq
        %v857 = vshrl.u32 %v856, 7
        %v858 = vsub.s32 0, %v857
        %v859 = vrot.slane %v855, %v858
        %v868 = vunpack.c.l.b16 %v847
        %v869 = vunpack.c.l.b16 %v848
        %v870 = vunpack.c.l.b16 %v849
        %v871 = vunpack.c.l.b16 %v850
        %v872 = vunpack.c.l.b16 %v851
        %v873 = vunpack.c.l.b16 %v852
        %v874 = vunpack.c.l.b16 %v853
        %v875 = vunpack.c.l.b16 %v854
        %v876 = vpack.c.b16 %v869, %v868
        %v877 = vpack.c.b16 %v871, %v870
        %v878 = vpack.c.b16 %v873, %v872
        %v879 = vpack.c.b16 %v875, %v874
        %v885 = vsel %vm541, %v845, 0
        %887 = vmatprep.subr.bf16.mxu0 0
        %888 = vmatpush1.bf16.msra.mxu0 %v876
        %889 = vmatprep.subr.bf16.mxu0 0
        %890 = vmatpush1.bf16.msra.mxu0 %v877
        %891 = vmatprep.subr.bf16.mxu0 0
        %892 = vmatpush1.bf16.msra.mxu0 %v878
        %893 = vmatprep.subr.bf16.mxu0 0
        %894 = vmatpush1.bf16.msra.mxu0 %v879
        %895 = vmatprep.subr.bf16.mxu0 0
        %896 = vmatpush1.bf16.msra.mxu0 0
        %897 = vmatprep.subr.bf16.mxu0 0
        %898 = vmatpush1.bf16.msra.mxu0 0
        %899 = vmatprep.subr.bf16.mxu0 0
        %900 = vmatpush1.bf16.msra.mxu0 0
        %901 = vmatprep.subr.bf16.mxu0 0
        %902 = vmatpush1.bf16.msra.mxu0 0
        %903 = vmatprep.subr.bf16.mxu0 0
        %904 = vmatpush1.bf16.msra.mxu0 0
        %905 = vmatprep.subr.bf16.mxu0 0
        %906 = vmatpush1.bf16.msra.mxu0 0
        %907 = vmatprep.subr.bf16.mxu0 0
        %908 = vmatpush1.bf16.msra.mxu0 0
        %909 = vmatprep.subr.bf16.mxu0 0
        %910 = vmatpush1.bf16.msra.mxu0 0
        %911 = vmatprep.subr.bf16.mxu0 0
        %912 = vmatpush1.bf16.msra.mxu0 0
        %913 = vmatprep.subr.bf16.mxu0 0
        %914 = vmatpush1.bf16.msra.mxu0 0
        %915 = vmatprep.subr.bf16.mxu0 0
        %916 = vmatpush1.bf16.msra.mxu0 0
        %917 = vmatprep.subr.bf16.mxu0 0
        %918 = vmatpush1.bf16.msra.mxu0 0
        %919 = vmatprep.mubr.bf16.mxu0 0
        %920 = vmatmul.mubr.bf16.gmra.mrb[0].mxu0 %v885
        %v921 = vpop.f32.mrb[0].mxu0
        %v922 = vadd.f32 %v859, %v921
        %v923 = vpop.f32.mrb[0].mxu0
        %v924 = vpop.f32.mrb[0].mxu0
        %v925 = vadd.f32 %v859, %v924
        %v926 = vpop.f32.mrb[0].mxu0
        %927 = vdwg.mxu0
        %v928 = vmax.f32 %v922, 0.0
        %v929 = vmax.f32 %v925, 0.0
        %v930 = vpack.c.bf16 %v929, %v928
        %s931 = scalar_lea.vmem [#allocation8], 160
        %v932 = vld [vmem:[%s931] sm:$0xf]
        %v933 = vld [vmem:[%s931 + $0x4] sm:$0xf]
        %v934 = vld [vmem:[%s931 + $0x8] sm:$0xf]
        %v935 = vld [vmem:[%s931 + $0xc] sm:$0xf]
        %v936 = vld [vmem:[%s931 + $0x10] sm:$0xf]
        %v937 = vld [vmem:[%s931 + $0x14] sm:$0xf]
        %v938 = vld [vmem:[%s931 + $0x18] sm:$0xf]
        %v939 = vld [vmem:[%s931 + $0x1c] sm:$0xf]
        %v940 = vld [vmem:[%s4 + $0x5] sm:$0x1]
        %v941 = vlaneseq
        %v942 = vshrl.u32 %v941, 7
        %v943 = vsub.s32 0, %v942
        %v944 = vrot.slane %v940, %v943
        %v953 = vunpack.c.l.b16 %v932
        %v954 = vunpack.c.l.b16 %v933
        %v955 = vunpack.c.l.b16 %v934
        %v956 = vunpack.c.l.b16 %v935
        %v957 = vunpack.c.l.b16 %v936
        %v958 = vunpack.c.l.b16 %v937
        %v959 = vunpack.c.l.b16 %v938
        %v960 = vunpack.c.l.b16 %v939
        %v961 = vpack.c.b16 %v954, %v953
        %v962 = vpack.c.b16 %v956, %v955
        %v963 = vpack.c.b16 %v958, %v957
        %v964 = vpack.c.b16 %v960, %v959
        %v970 = vsel %vm541, %v930, 0
        %972 = vmatprep.subr.bf16.mxu0 0
        %973 = vmatpush1.bf16.msra.mxu0 %v961
        %974 = vmatprep.subr.bf16.mxu0 0
        %975 = vmatpush1.bf16.msra.mxu0 %v962
        %976 = vmatprep.subr.bf16.mxu0 0
        %977 = vmatpush1.bf16.msra.mxu0 %v963
        %978 = vmatprep.subr.bf16.mxu0 0
        %979 = vmatpush1.bf16.msra.mxu0 %v964
        %980 = vmatprep.subr.bf16.mxu0 0
        %981 = vmatpush1.bf16.msra.mxu0 0
        %982 = vmatprep.subr.bf16.mxu0 0
        %983 = vmatpush1.bf16.msra.mxu0 0
        %984 = vmatprep.subr.bf16.mxu0 0
        %985 = vmatpush1.bf16.msra.mxu0 0
        %986 = vmatprep.subr.bf16.mxu0 0
        %987 = vmatpush1.bf16.msra.mxu0 0
        %988 = vmatprep.subr.bf16.mxu0 0
        %989 = vmatpush1.bf16.msra.mxu0 0
        %990 = vmatprep.subr.bf16.mxu0 0
        %991 = vmatpush1.bf16.msra.mxu0 0
        %992 = vmatprep.subr.bf16.mxu0 0
        %993 = vmatpush1.bf16.msra.mxu0 0
        %994 = vmatprep.subr.bf16.mxu0 0
        %995 = vmatpush1.bf16.msra.mxu0 0
        %996 = vmatprep.subr.bf16.mxu0 0
        %997 = vmatpush1.bf16.msra.mxu0 0
        %998 = vmatprep.subr.bf16.mxu0 0
        %999 = vmatpush1.bf16.msra.mxu0 0
        %1000 = vmatprep.subr.bf16.mxu0 0
        %1001 = vmatpush1.bf16.msra.mxu0 0
        %1002 = vmatprep.subr.bf16.mxu0 0
        %1003 = vmatpush1.bf16.msra.mxu0 0
        %1004 = vmatprep.mubr.bf16.mxu0 0
        %1005 = vmatmul.mubr.bf16.gmra.mrb[0].mxu0 %v970
        %v1006 = vpop.f32.mrb[0].mxu0
        %v1007 = vadd.f32 %v944, %v1006
        %v1008 = vpop.f32.mrb[0].mxu0
        %v1009 = vpop.f32.mrb[0].mxu0
        %v1010 = vadd.f32 %v944, %v1009
        %v1011 = vpop.f32.mrb[0].mxu0
        %1012 = vdwg.mxu0
        %v1013 = vmax.f32 %v1007, 0.0
        %v1014 = vmax.f32 %v1010, 0.0
        %v1015 = vadd.f32 %v758, %v1013
        %v1016 = vadd.f32 %v759, %v1014
        %v1017 = vld [vmem:[#allocation2] sm:$0x1]
        %v1018 = vsel %vm541, %v1015, 0.0
        %v1019 = vsel %vm541, %v1016, 0.0
        %v1020 = vadd.f32 %v1018, %v1019
        %v1021 = vrot.slane %v1020, 4
        %v1022 = vadd.f32 %v1020, %v1021
        %v1023 = vrot.slane %v1022, 2
        %v1024 = vadd.f32 %v1022, %v1023
        %v1025 = vrot.slane %v1024, 1
        %v1026 = vadd.f32 %v1024, %v1025
        %v1027 = vadd.f32 %v1017, %v1026
        %vm1028 = vcmask 516096
        %1029 = vst.msk [vmem:[#allocation2] sm:$0x1] %vm1028, %v1027
        // Predicated region
        $region81: #{tpu_custom_call.1} parent=55 // pred_check
          %p1030 = pneg %p426
        $region82: #{tpu_custom_call.1} parent=55 // pred_check_branch
          %1032 = sbr.rel (%p1030) target = $region84
        $region83: #{tpu_custom_call.1} parent=55 // pred_region
          %v1033 = vld [vmem:[#allocation2] sm:$0x1]
          %v1034 = vmul.f32 %v1033, 0.0625
          %v1035 = vpack.c.bf16 %v1034, %v1034
          %v1036 = vld [vmem:[#allocation9] sm:$0xf]
          %v1037 = vld [vmem:[#allocation9 + $0x4] sm:$0xf]
          %v1038 = vld [vmem:[#allocation9 + $0x8] sm:$0xf]
          %v1039 = vld [vmem:[#allocation9 + $0xc] sm:$0xf]
          %v1040 = vld [vmem:[#allocation9 + $0x10] sm:$0xf]
          %v1041 = vld [vmem:[#allocation9 + $0x14] sm:$0xf]
          %v1042 = vld [vmem:[#allocation9 + $0x18] sm:$0xf]
          %v1043 = vld [vmem:[#allocation9 + $0x1c] sm:$0xf]
          %v1044 = vld [vmem:[%s6] sm:$0x1]
          %v1053 = vunpack.c.l.b16 %v1036
          %v1054 = vunpack.c.l.b16 %v1037
          %v1055 = vunpack.c.l.b16 %v1038
          %v1056 = vunpack.c.l.b16 %v1039
          %v1057 = vunpack.c.l.b16 %v1040
          %v1058 = vunpack.c.l.b16 %v1041
          %v1059 = vunpack.c.l.b16 %v1042
          %v1060 = vunpack.c.l.b16 %v1043
          %v1061 = vpack.c.b16 %v1054, %v1053
          %v1062 = vpack.c.b16 %v1056, %v1055
          %v1063 = vpack.c.b16 %v1058, %v1057
          %v1064 = vpack.c.b16 %v1060, %v1059
          %v1070 = vsel %vm541, %v1035, 0
          %1072 = vmatprep.subr.bf16.mxu0 0
          %1073 = vmatpush1.bf16.msra.mxu0 %v1061
          %1074 = vmatprep.subr.bf16.mxu0 0
          %1075 = vmatpush1.bf16.msra.mxu0 %v1062
          %1076 = vmatprep.subr.bf16.mxu0 0
          %1077 = vmatpush1.bf16.msra.mxu0 %v1063
          %1078 = vmatprep.subr.bf16.mxu0 0
          %1079 = vmatpush1.bf16.msra.mxu0 %v1064
          %1080 = vmatprep.subr.bf16.mxu0 0
          %1081 = vmatpush1.bf16.msra.mxu0 0
          %1082 = vmatprep.subr.bf16.mxu0 0
          %1083 = vmatpush1.bf16.msra.mxu0 0
          %1084 = vmatprep.subr.bf16.mxu0 0
          %1085 = vmatpush1.bf16.msra.mxu0 0
          %1086 = vmatprep.subr.bf16.mxu0 0
          %1087 = vmatpush1.bf16.msra.mxu0 0
          %1088 = vmatprep.subr.bf16.mxu0 0
          %1089 = vmatpush1.bf16.msra.mxu0 0
          %1090 = vmatprep.subr.bf16.mxu0 0
          %1091 = vmatpush1.bf16.msra.mxu0 0
          %1092 = vmatprep.subr.bf16.mxu0 0
          %1093 = vmatpush1.bf16.msra.mxu0 0
          %1094 = vmatprep.subr.bf16.mxu0 0
          %1095 = vmatpush1.bf16.msra.mxu0 0
          %1096 = vmatprep.subr.bf16.mxu0 0
          %1097 = vmatpush1.bf16.msra.mxu0 0
          %1098 = vmatprep.subr.bf16.mxu0 0
          %1099 = vmatpush1.bf16.msra.mxu0 0
          %1100 = vmatprep.subr.bf16.mxu0 0
          %1101 = vmatpush1.bf16.msra.mxu0 0
          %1102 = vmatprep.subr.bf16.mxu0 0
          %1103 = vmatpush1.bf16.msra.mxu0 0
          %1104 = vmatprep.mubr.bf16.mxu0 0
          %1105 = vmatmul.mubr.bf16.gmra.mrb[0].mxu0 %v1070
          %v1106 = vpop.f32.mrb[0].mxu0
          %v1107 = vadd.f32 %v1044, %v1106
          %v1108 = vpop.f32.mrb[0].mxu0
          %v1109 = vpop.f32.mrb[0].mxu0
          %v1110 = vpop.f32.mrb[0].mxu0
          %1111 = vdwg.mxu0
          %v1112 = vmax.f32 %v1107, 0.0
          %v1113 = vpack.c.bf16 %v1112, %v1112
          %s1114 = scalar_lea.vmem [#allocation9], 32
          %v1115 = vld [vmem:[%s1114] sm:$0xf]
          %v1116 = vld [vmem:[%s1114 + $0x4] sm:$0xf]
          %v1117 = vld [vmem:[%s1114 + $0x8] sm:$0xf]
          %v1118 = vld [vmem:[%s1114 + $0xc] sm:$0xf]
          %v1119 = vld [vmem:[%s1114 + $0x10] sm:$0xf]
          %v1120 = vld [vmem:[%s1114 + $0x14] sm:$0xf]
          %v1121 = vld [vmem:[%s1114 + $0x18] sm:$0xf]
          %v1122 = vld [vmem:[%s1114 + $0x1c] sm:$0xf]
          %v1123 = vld [vmem:[%s6 + $0x1] sm:$0x1]
          %v1132 = vunpack.c.l.b16 %v1115
          %v1133 = vunpack.c.l.b16 %v1116
          %v1134 = vunpack.c.l.b16 %v1117
          %v1135 = vunpack.c.l.b16 %v1118
          %v1136 = vunpack.c.l.b16 %v1119
          %v1137 = vunpack.c.l.b16 %v1120
          %v1138 = vunpack.c.l.b16 %v1121
          %v1139 = vunpack.c.l.b16 %v1122
          %v1140 = vpack.c.b16 %v1133, %v1132
          %v1141 = vpack.c.b16 %v1135, %v1134
          %v1142 = vpack.c.b16 %v1137, %v1136
          %v1143 = vpack.c.b16 %v1139, %v1138
          %v1149 = vsel %vm541, %v1113, 0
          %1151 = vmatprep.subr.bf16.mxu0 0
          %1152 = vmatpush1.bf16.msra.mxu0 %v1140
          %1153 = vmatprep.subr.bf16.mxu0 0
          %1154 = vmatpush1.bf16.msra.mxu0 %v1141
          %1155 = vmatprep.subr.bf16.mxu0 0
          %1156 = vmatpush1.bf16.msra.mxu0 %v1142
          %1157 = vmatprep.subr.bf16.mxu0 0
          %1158 = vmatpush1.bf16.msra.mxu0 %v1143
          %1159 = vmatprep.subr.bf16.mxu0 0
          %1160 = vmatpush1.bf16.msra.mxu0 0
          %1161 = vmatprep.subr.bf16.mxu0 0
          %1162 = vmatpush1.bf16.msra.mxu0 0
          %1163 = vmatprep.subr.bf16.mxu0 0
          %1164 = vmatpush1.bf16.msra.mxu0 0
          %1165 = vmatprep.subr.bf16.mxu0 0
          %1166 = vmatpush1.bf16.msra.mxu0 0
          %1167 = vmatprep.subr.bf16.mxu0 0
          %1168 = vmatpush1.bf16.msra.mxu0 0
          %1169 = vmatprep.subr.bf16.mxu0 0
          %1170 = vmatpush1.bf16.msra.mxu0 0
          %1171 = vmatprep.subr.bf16.mxu0 0
          %1172 = vmatpush1.bf16.msra.mxu0 0
          %1173 = vmatprep.subr.bf16.mxu0 0
          %1174 = vmatpush1.bf16.msra.mxu0 0
          %1175 = vmatprep.subr.bf16.mxu0 0
          %1176 = vmatpush1.bf16.msra.mxu0 0
          %1177 = vmatprep.subr.bf16.mxu0 0
          %1178 = vmatpush1.bf16.msra.mxu0 0
          %1179 = vmatprep.subr.bf16.mxu0 0
          %1180 = vmatpush1.bf16.msra.mxu0 0
          %1181 = vmatprep.subr.bf16.mxu0 0
          %1182 = vmatpush1.bf16.msra.mxu0 0
          %1183 = vmatprep.mubr.bf16.mxu0 0
          %1184 = vmatmul.mubr.bf16.gmra.mrb[0].mxu0 %v1149
          %v1185 = vpop.f32.mrb[0].mxu0
          %v1186 = vadd.f32 %v1123, %v1185
          %v1187 = vpop.f32.mrb[0].mxu0
          %v1188 = vpop.f32.mrb[0].mxu0
          %v1189 = vpop.f32.mrb[0].mxu0
          %1190 = vdwg.mxu0
          %v1191 = vmax.f32 %v1186, 0.0
          %v1192 = vpack.c.bf16 %v1191, %v1191
          %v1193 = vld [vmem:[#allocation11] sm:$0xf]
          %v1194 = vld [vmem:[#allocation11 + $0x4] sm:$0xf]
          %v1195 = vld [vmem:[#allocation11 + $0x8] sm:$0xf]
          %v1196 = vld [vmem:[#allocation11 + $0xc] sm:$0xf]
          %v1197 = vld [vmem:[#allocation11 + $0x10] sm:$0xf]
          %v1198 = vld [vmem:[#allocation11 + $0x14] sm:$0xf]
          %v1199 = vld [vmem:[#allocation11 + $0x18] sm:$0xf]
          %v1200 = vld [vmem:[#allocation11 + $0x1c] sm:$0xf]
          %v1201 = vld [vmem:[%s8] sm:$0x1]
          %v1210 = vunpack.c.l.b16 %v1193
          %v1211 = vunpack.c.l.b16 %v1194
          %v1212 = vunpack.c.l.b16 %v1195
          %v1213 = vunpack.c.l.b16 %v1196
          %v1214 = vunpack.c.l.b16 %v1197
          %v1215 = vunpack.c.l.b16 %v1198
          %v1216 = vunpack.c.l.b16 %v1199
          %v1217 = vunpack.c.l.b16 %v1200
          %v1218 = vpack.c.b16 %v1211, %v1210
          %v1219 = vpack.c.b16 %v1213, %v1212
          %v1220 = vpack.c.b16 %v1215, %v1214
          %v1221 = vpack.c.b16 %v1217, %v1216
          %v1227 = vsel %vm541, %v1192, 0
          %1229 = vmatprep.subr.bf16.mxu0 0
          %1230 = vmatpush1.bf16.msra.mxu0 %v1218
          %1231 = vmatprep.subr.bf16.mxu0 0
          %1232 = vmatpush1.bf16.msra.mxu0 %v1219
          %1233 = vmatprep.subr.bf16.mxu0 0
          %1234 = vmatpush1.bf16.msra.mxu0 %v1220
          %1235 = vmatprep.subr.bf16.mxu0 0
          %1236 = vmatpush1.bf16.msra.mxu0 %v1221
          %1237 = vmatprep.subr.bf16.mxu0 0
          %1238 = vmatpush1.bf16.msra.mxu0 0
          %1239 = vmatprep.subr.bf16.mxu0 0
          %1240 = vmatpush1.bf16.msra.mxu0 0
          %1241 = vmatprep.subr.bf16.mxu0 0
          %1242 = vmatpush1.bf16.msra.mxu0 0
          %1243 = vmatprep.subr.bf16.mxu0 0
          %1244 = vmatpush1.bf16.msra.mxu0 0
          %1245 = vmatprep.subr.bf16.mxu0 0
          %1246 = vmatpush1.bf16.msra.mxu0 0
          %1247 = vmatprep.subr.bf16.mxu0 0
          %1248 = vmatpush1.bf16.msra.mxu0 0
          %1249 = vmatprep.subr.bf16.mxu0 0
          %1250 = vmatpush1.bf16.msra.mxu0 0
          %1251 = vmatprep.subr.bf16.mxu0 0
          %1252 = vmatpush1.bf16.msra.mxu0 0
          %1253 = vmatprep.subr.bf16.mxu0 0
          %1254 = vmatpush1.bf16.msra.mxu0 0
          %1255 = vmatprep.subr.bf16.mxu0 0
          %1256 = vmatpush1.bf16.msra.mxu0 0
          %1257 = vmatprep.subr.bf16.mxu0 0
          %1258 = vmatpush1.bf16.msra.mxu0 0
          %1259 = vmatprep.subr.bf16.mxu0 0
          %1260 = vmatpush1.bf16.msra.mxu0 0
          %1261 = vmatprep.mubr.bf16.mxu0 0
          %1262 = vmatmul.mubr.bf16.gmra.mrb[0].mxu0 %v1227
          %v1263 = vpop.f32.mrb[0].mxu0
          %v1264 = vadd.f32 %v1201, %v1263
          %v1265 = vpop.f32.mrb[0].mxu0
          %v1266 = vpop.f32.mrb[0].mxu0
          %v1267 = vpop.f32.mrb[0].mxu0
          %1268 = vdwg.mxu0
          %1269 = vst [vmem:[%s423] sm:$0x1] %v1264
        $region84: #{tpu_custom_call.1} parent=55 // pred_fallthru
          _
        %s1270 = sand.u32 %s244, 1
        %s1271 = scalar_lea.sflag [#allocation5], %s1270
        %s1272 = sand.u32 %s244, 1
        %s1273 = scalar_lea.vmem [#allocation12], %s1272
        // Predicated region
        $region85: #{tpu_custom_call.1} parent=55 // pred_check
          %p1274 = pneg %p254
        $region86: #{tpu_custom_call.1} parent=55 // pred_check_branch
          %1276 = sbr.rel (%p1274) target = $region88
        $region87: #{tpu_custom_call.1} parent=55 // pred_region
          %s1278 = ssub.s32 16, 16
          %1279 = vsyncadd %s1271, %s1278
          %s1280 = smul.addr %s32, 16
          %s1281 = scalar_lea.hbm %s9, %s1280
          %s1283 = sshll.u32 %s1273, 4
          %s1284 = int_to_ptr.vmem [resolvable:$true] %s1283
          %1286 = dma.vmem_to_hbm [thread:$0]  %s1284, 16, %s1281, %s1271
        $region88: #{tpu_custom_call.1} parent=55 // pred_fallthru
          _
      $region56: #{tpu_custom_call.1} parent=5 // pred_fallthru
        _
      %p1287 = scmp.le.s32.totalorder 2, %s23
      // Predicated region
      $region89: #{tpu_custom_call.1} parent=5 // pred_check
        %p1288 = pneg %p1287
      $region90: #{tpu_custom_call.1} parent=5 // pred_check_branch
        %1290 = sbr.rel (%p1288) target = $region92
      $region91: #{tpu_custom_call.1} parent=5 // pred_region
        %s1291 = ssub.s32 %s23, 2
        // Predicated region
        $region93: #{tpu_custom_call.1} parent=91 // pred_check
          %p1292 = pneg %p260
        $region94: #{tpu_custom_call.1} parent=91 // pred_check_branch
          %1294 = sbr.rel (%p1292) target = $region96
        $region95: #{tpu_custom_call.1} parent=91 // pred_region
          %s1295 = sand.u32 %s245, 1
          %s1296 = scalar_lea.sflag [#allocation5], %s1295
          %s1297 = sand.u32 %s245, 1
          %s1298 = scalar_lea.vmem [#allocation12], %s1297
          %1299 = dma.done %s1296, 16
        $region96: #{tpu_custom_call.1} parent=91 // pred_fallthru
          _
      $region92: #{tpu_custom_call.1} parent=5 // pred_fallthru
        _
    $region6: #{tpu_custom_call.1} parent=1 // loop_footer
      %s27 = sadd.s32 1, %s23
    $region7: #{tpu_custom_call.1} parent=1 // loop_footer_branch
      %22 = sbr.rel target = $region3
    $region8: #{tpu_custom_call.1} parent=1 // loop_exit
      _
    %1300 = vsyncpa [#allocation4], 1
    %s1301 = scalar_lea.sflag [#allocation4], 1
    %1302 = vsyncpa %s1301, 1
    %1303 = vsyncpa [#allocation7], 1
    %1304 = vsyncpa [#allocation10], 1
    %1305 = vsyncpa [#allocation5], 1
    %s1306 = scalar_lea.sflag [#allocation5], 1
    %1307 = vsyncpa %s1306, 1

</llo_original>
